<compile_context>
chip_gen: v7x
topology: tpu7x:2x2x1
jax: 0.10.0
libtpu: 0.0.40
codegen_flags: <defaults>
</compile_context>

<pallas_src>
import functools

import jax
import jax.numpy as jnp
from jax import lax
from jax.experimental import pallas as pl
from jax.experimental.pallas import tpu as pltpu

# ----------------------------------------------------------------------------
# Small hyperparameters (module structure kept identical; original uses
# n_embd=384, n_head=6, n_layer=6, block_size=256 — scaled down for a quick test)
# ----------------------------------------------------------------------------
VOCAB_SIZE = 65
VOCAB_PAD  = 128                   # lane-dense padded LM-head width
N_EMBD     = 128
N_HEAD     = 4
HEAD_SIZE  = N_EMBD // N_HEAD      # 32
N_LAYER    = 2
BLOCK_SIZE = 32                    # max context length
LN_EPS     = 1e-5


def _row_tile(m):
    """Largest (8,128)-friendly row tile <= 512 that divides M (keeps the FFN
    intermediate small enough for v7x's 64 MiB VMEM at production shapes)."""
    for t in (512, 256, 128, 64, 32, 16, 8):
        if m % t == 0:
            return t
    return m


def _layernorm(x, g, b):
    mean = jnp.mean(x, axis=-1, keepdims=True)
    var = jnp.mean((x - mean) ** 2, axis=-1, keepdims=True)
    return (x - mean) * lax.rsqrt(var + LN_EPS) * g + b


# ----------------------------------------------------------------------------
# Fused kernel 1: LN1 + QKV matmul + causal MHA + output proj + residual
# (one grid step per batch element; all heads handled inside)
# ----------------------------------------------------------------------------
def _attn_block_kernel(x_ref, g_ref, b_ref, wqkv_ref, wo_ref, bo_ref, o_ref):
    x = x_ref[...]                                   # (T, C) f32, residual input
    T, C = x.shape

    h = _layernorm(x, g_ref[...], b_ref[...])        # f32 LN math

    # fused QKV projection: bf16 operands, f32 accumulation on the MXU
    qkv = jnp.dot(h.astype(jnp.bfloat16), wqkv_ref[...],
                  preferred_element_type=jnp.float32)          # (T, 3C)
    q = qkv[:, 0:C].astype(jnp.bfloat16)
    k = qkv[:, C:2 * C].astype(jnp.bfloat16)
    v = qkv[:, 2 * C:3 * C].astype(jnp.bfloat16)

    scale = jnp.float32(HEAD_SIZE) ** -0.5
    row = lax.broadcasted_iota(jnp.int32, (T, T), 0)
    col = lax.broadcasted_iota(jnp.int32, (T, T), 1)
    causal = col <= row                              # tril mask (diag kept)

    outs = []
    for hd in range(N_HEAD):
        s0, s1 = hd * HEAD_SIZE, (hd + 1) * HEAD_SIZE
        qh, kh, vh = q[:, s0:s1], k[:, s0:s1], v[:, s0:s1]
        # q @ k^T without materializing a K transpose (contract dim 1 vs dim 1)
        wei = lax.dot_general(qh, kh, (((1,), (1,)), ((), ())),
                              preferred_element_type=jnp.float32) * scale
        wei = jnp.where(causal, wei, -jnp.inf)
        m = jnp.max(wei, axis=-1, keepdims=True)
        e = jnp.exp(wei - m)                         # f32 softmax math
        p = e * pl.reciprocal(jnp.sum(e, axis=-1, keepdims=True), approx=True)
        outs.append(jnp.dot(p.astype(jnp.bfloat16), vh,
                            preferred_element_type=jnp.float32))  # (T, hs)

    o = jnp.concatenate(outs, axis=-1)               # (T, C) f32
    proj = jnp.dot(o.astype(jnp.bfloat16), wo_ref[...],
                   preferred_element_type=jnp.float32) + bo_ref[...]
    o_ref[...] = x + proj                            # residual add in VMEM


def attention_block(x, ln_g, ln_b, wqkv, wo, bo):
    """x: (B, T, C) f32 -> x + MHA(LN1(x)), (B, T, C) f32."""
    B, T, C = x.shape
    return pl.pallas_call(
        _attn_block_kernel,
        out_shape=jax.ShapeDtypeStruct((B, T, C), jnp.float32),
        grid=(B,),
        in_specs=[
            pl.BlockSpec((None, T, C), lambda b: (b, 0, 0)),
            pl.BlockSpec((1, C), lambda b: (0, 0)),
            pl.BlockSpec((1, C), lambda b: (0, 0)),
            pl.BlockSpec((C, 3 * C), lambda b: (0, 0)),
            pl.BlockSpec((C, C), lambda b: (0, 0)),
            pl.BlockSpec((1, C), lambda b: (0, 0)),
        ],
        out_specs=pl.BlockSpec((None, T, C), lambda b: (b, 0, 0)),
        compiler_params=pltpu.CompilerParams(
            dimension_semantics=("parallel",)),
    )(x, ln_g.reshape(1, C), ln_b.reshape(1, C), wqkv, wo, bo.reshape(1, C))


# ----------------------------------------------------------------------------
# Fused kernel 2: LN2 + FFN (Linear -> ReLU -> Linear) + residual, row-tiled
# ----------------------------------------------------------------------------
def _ffn_block_kernel(x_ref, g_ref, b_ref, w1_ref, b1_ref, w2_ref, b2_ref,
                      o_ref):
    x = x_ref[...]                                   # (tm, C) f32
    h = _layernorm(x, g_ref[...], b_ref[...])
    h1 = jnp.dot(h.astype(jnp.bfloat16), w1_ref[...],
                 preferred_element_type=jnp.float32) + b1_ref[...]
    h1 = jnp.maximum(h1, 0.0)                        # ReLU
    ff = jnp.dot(h1.astype(jnp.bfloat16), w2_ref[...],
                 preferred_element_type=jnp.float32) + b2_ref[...]
    o_ref[...] = x + ff                              # dropout=identity; residual


def ffn_block(x2d, ln_g, ln_b, w1, b1, w2, b2):
    """x2d: (M, C) f32 -> x + FFN(LN2(x)), (M, C) f32."""
    M, C = x2d.shape
    H = w1.shape[1]
    tm = _row_tile(M)
    return pl.pallas_call(
        _ffn_block_kernel,
        out_shape=jax.ShapeDtypeStruct((M, C), jnp.float32),
        grid=(M // tm,),
        in_specs=[
            pl.BlockSpec((tm, C), lambda i: (i, 0)),
            pl.BlockSpec((1, C), lambda i: (0, 0)),
            pl.BlockSpec((1, C), lambda i: (0, 0)),
            pl.BlockSpec((C, H), lambda i: (0, 0)),
            pl.BlockSpec((1, H), lambda i: (0, 0)),
            pl.BlockSpec((H, C), lambda i: (0, 0)),
            pl.BlockSpec((1, C), lambda i: (0, 0)),
        ],
        out_specs=pl.BlockSpec((tm, C), lambda i: (i, 0)),
        compiler_params=pltpu.CompilerParams(
            dimension_semantics=("parallel",)),
    )(x2d, ln_g.reshape(1, C), ln_b.reshape(1, C), w1, b1.reshape(1, H),
      w2, b2.reshape(1, C))


# ----------------------------------------------------------------------------
# Fused kernel 3: final LayerNorm + LM head (lane-dense padded vocab)
# ----------------------------------------------------------------------------
def _lm_head_kernel(x_ref, g_ref, b_ref, w_ref, bias_ref, o_ref):
    h = _layernorm(x_ref[...], g_ref[...], b_ref[...])
    o_ref[...] = jnp.dot(h.astype(jnp.bfloat16), w_ref[...],
                         preferred_element_type=jnp.float32) + bias_ref[...]


def lm_head(x2d, ln_g, ln_b, w_pad, b_pad):
    """x2d: (M, C) -> padded logits (M, VOCAB_PAD) f32 (lane-dense store)."""
    M, C = x2d.shape
    V = w_pad.shape[1]
    tm = _row_tile(M)
    return pl.pallas_call(
        _lm_head_kernel,
        out_shape=jax.ShapeDtypeStruct((M, V), jnp.float32),
        grid=(M // tm,),
        in_specs=[
            pl.BlockSpec((tm, C), lambda i: (i, 0)),
            pl.BlockSpec((1, C), lambda i: (0, 0)),
            pl.BlockSpec((1, C), lambda i: (0, 0)),
            pl.BlockSpec((C, V), lambda i: (0, 0)),
            pl.BlockSpec((1, V), lambda i: (0, 0)),
        ],
        out_specs=pl.BlockSpec((tm, V), lambda i: (i, 0)),
        compiler_params=pltpu.CompilerParams(
            dimension_semantics=("parallel",)),
    )(x2d, ln_g.reshape(1, C), ln_b.reshape(1, C), w_pad, b_pad.reshape(1, V))


# ----------------------------------------------------------------------------
# Parameter construction (deterministic, synthetic — not a checkpoint load)
# ----------------------------------------------------------------------------
def init_params(key):
    def nrm(key, shape, scale=0.02):
        return (scale * jax.random.normal(key, shape)).astype(jnp.float32)

    keys = iter(jax.random.split(key, 8 + N_LAYER * 8))

    lm_w = nrm(next(keys), (N_EMBD, VOCAB_SIZE))
    lm_w_pad = jnp.zeros((N_EMBD, VOCAB_PAD), jnp.float32)
    lm_w_pad = lm_w_pad.at[:, :VOCAB_SIZE].set(lm_w)

    params = {
        "tok_emb": nrm(next(keys), (VOCAB_SIZE, N_EMBD)),
        "pos_emb": nrm(next(keys), (BLOCK_SIZE, N_EMBD)),
        "ln_f_g": jnp.ones((N_EMBD,), jnp.float32),
        "ln_f_b": jnp.zeros((N_EMBD,), jnp.float32),
        "lm_w": lm_w_pad.astype(jnp.bfloat16),       # padded, bf16 MXU operand
        "lm_b": jnp.zeros((VOCAB_PAD,), jnp.float32),
        "blocks": [],
    }
    for _ in range(N_LAYER):
        wq = nrm(next(keys), (N_EMBD, N_HEAD * HEAD_SIZE))
        wk = nrm(next(keys), (N_EMBD, N_HEAD * HEAD_SIZE))
        wv = nrm(next(keys), (N_EMBD, N_HEAD * HEAD_SIZE))
        blk = {
            "ln1_g": jnp.ones((N_EMBD,), jnp.float32),
            "ln1_b": jnp.zeros((N_EMBD,), jnp.float32),
            "ln2_g": jnp.ones((N_EMBD,), jnp.float32),
            "ln2_b": jnp.zeros((N_EMBD,), jnp.float32),
            # fused no-bias Q/K/V Linears: columns [0:C]=Q, [C:2C]=K, [2C:3C]=V,
            # each ordered head-major (head h in columns [h*hs:(h+1)*hs])
            "wqkv": jnp.concatenate([wq, wk, wv], axis=1).astype(jnp.bfloat16),
            "wo": nrm(next(keys), (N_HEAD * HEAD_SIZE, N_EMBD)).astype(jnp.bfloat16),
            "bo": jnp.zeros((N_EMBD,), jnp.float32),
            "w1": nrm(next(keys), (N_EMBD, 4 * N_EMBD)).astype(jnp.bfloat16),
            "b1": jnp.zeros((4 * N_EMBD,), jnp.float32),
            "w2": nrm(next(keys), (4 * N_EMBD, N_EMBD)).astype(jnp.bfloat16),
            "b2": jnp.zeros((N_EMBD,), jnp.float32),
        }
        params["blocks"].append(blk)
    return params


# ----------------------------------------------------------------------------
# Forward pass (glue in JAX, hot paths in fused Pallas kernels)
# ----------------------------------------------------------------------------
def gpt_forward(params, idx, targets=None):
    B, T = idx.shape
    C = N_EMBD

    # TODO(synk): token/position embedding gather kept as plain-JAX indexing
    tok_emb = params["tok_emb"][idx]                 # (B, T, C)
    pos_emb = params["pos_emb"][:T]                  # (T, C)
    x = tok_emb + pos_emb                            # (B, T, C) f32

    for blk in params["blocks"]:
        # x = x + MHA(LN1(x))   — single fused kernel, residual add in VMEM
        x = attention_block(x, blk["ln1_g"], blk["ln1_b"],
                            blk["wqkv"], blk["wo"], blk["bo"])
        # x = x + FFN(LN2(x))   — single fused kernel, residual add in VMEM
        x = ffn_block(x.reshape(B * T, C), blk["ln2_g"], blk["ln2_b"],
                      blk["w1"], blk["b1"], blk["w2"], blk["b2"]
                      ).reshape(B, T, C)

    logits_pad = lm_head(x.reshape(B * T, C), params["ln_f_g"],
                         params["ln_f_b"], params["lm_w"], params["lm_b"])
    logits = logits_pad[:, :VOCAB_SIZE].reshape(B, T, VOCAB_SIZE)

    loss = None
    if targets is not None:
        # TODO(synk): cross_entropy loss kept in plain JAX (not a Pallas hot path)
        lg = logits.reshape(B * T, VOCAB_SIZE)
        tg = targets.reshape(B * T)
        logz = jax.nn.logsumexp(lg, axis=-1)
        loss = jnp.mean(logz - jnp.take_along_axis(lg, tg[:, None], axis=-1)[:, 0])

    return logits, loss


# ----------------------------------------------------------------------------
# Main
# ----------------------------------------------------------------------------
if __name__ == "__main__":
    key = jax.random.PRNGKey(0)
    pkey, dkey = jax.random.split(key)
    params = init_params(pkey)

    B, T = 2, 16
    idx = jax.random.randint(dkey, (B, T), 0, VOCAB_SIZE, dtype=jnp.int32)

    logits, loss = jax.jit(functools.partial(gpt_forward, params))(idx)
    logits = jax.block_until_ready(logits)

    assert logits.shape == (B, T, VOCAB_SIZE)
    assert logits.dtype == jnp.float32
    assert loss is None
    print("KERNEL_OK")
</pallas_src>

<mosaic_0001>
module attributes {stable_mosaic.version = 11 : i64} {
  func.func @_ffn_block_kernel(%arg0: i32, %arg1: memref<32x128xf32, #tpu.memory_space<vmem>>, %arg2: memref<1x128xf32, #tpu.memory_space<vmem>>, %arg3: memref<1x128xf32, #tpu.memory_space<vmem>>, %arg4: memref<128x512xbf16, #tpu.memory_space<vmem>>, %arg5: memref<1x512xf32, #tpu.memory_space<vmem>>, %arg6: memref<512x128xbf16, #tpu.memory_space<vmem>>, %arg7: memref<1x128xf32, #tpu.memory_space<vmem>>, %arg8: memref<32x128xf32, #tpu.memory_space<vmem>>) attributes {dimension_semantics = [#tpu.dimension_semantics<parallel>], iteration_bounds = array<i64: 1>, scalar_prefetch = 0 : i64, scratch_operands = 0 : i64, tpu.core_type = #tpu.core_type<tc>, window_params = [{transform_indices = @transform_0, window_bounds = array<i64: 32, 128>}, {pipeline_mode = #tpu.pipeline_mode<synchronous>, transform_indices = @transform_1, window_bounds = array<i64: 1, 128>}, {pipeline_mode = #tpu.pipeline_mode<synchronous>, transform_indices = @transform_2, window_bounds = array<i64: 1, 128>}, {pipeline_mode = #tpu.pipeline_mode<synchronous>, transform_indices = @transform_3, window_bounds = array<i64: 128, 512>}, {pipeline_mode = #tpu.pipeline_mode<synchronous>, transform_indices = @transform_4, window_bounds = array<i64: 1, 512>}, {pipeline_mode = #tpu.pipeline_mode<synchronous>, transform_indices = @transform_5, window_bounds = array<i64: 512, 128>}, {pipeline_mode = #tpu.pipeline_mode<synchronous>, transform_indices = @transform_6, window_bounds = array<i64: 1, 128>}, {transform_indices = @transform_7, window_bounds = array<i64: 32, 128>}]} {
    %c0 = arith.constant 0 : index
    %c0_0 = arith.constant 0 : index
    %0 = vector.load %arg1[%c0, %c0_0] : memref<32x128xf32, #tpu.memory_space<vmem>>, vector<32x128xf32>
    %c0_1 = arith.constant 0 : index
    %c0_2 = arith.constant 0 : index
    %1 = vector.load %arg2[%c0_1, %c0_2] : memref<1x128xf32, #tpu.memory_space<vmem>>, vector<1x128xf32>
    %c0_3 = arith.constant 0 : index
    %c0_4 = arith.constant 0 : index
    %2 = vector.load %arg3[%c0_3, %c0_4] : memref<1x128xf32, #tpu.memory_space<vmem>>, vector<1x128xf32>
    %cst = arith.constant dense<0.000000e+00> : vector<32xf32>
    %3 = vector.multi_reduction <add>, %0, %cst [1] : vector<32x128xf32> to vector<32xf32>
    %4 = vector.shape_cast %3 : vector<32xf32> to vector<32x1xf32>
    %cst_5 = arith.constant 1.280000e+02 : f32
    %5 = vector.broadcast %cst_5 : f32 to vector<32x1xf32>
    %6 = arith.divf %4, %5 : vector<32x1xf32>
    %7 = vector.broadcast %6 : vector<32x1xf32> to vector<32x128xf32>
    %8 = arith.subf %0, %7 : vector<32x128xf32>
    %9 = arith.mulf %8, %8 : vector<32x128xf32>
    %cst_6 = arith.constant dense<0.000000e+00> : vector<32xf32>
    %10 = vector.multi_reduction <add>, %9, %cst_6 [1] : vector<32x128xf32> to vector<32xf32>
    %11 = vector.shape_cast %10 : vector<32xf32> to vector<32x1xf32>
    %cst_7 = arith.constant 1.280000e+02 : f32
    %12 = vector.broadcast %cst_7 : f32 to vector<32x1xf32>
    %13 = arith.divf %11, %12 : vector<32x1xf32>
    %14 = vector.broadcast %6 : vector<32x1xf32> to vector<32x128xf32>
    %15 = arith.subf %0, %14 : vector<32x128xf32>
    %cst_8 = arith.constant 9.99999974E-6 : f32
    %16 = vector.broadcast %cst_8 : f32 to vector<32x1xf32>
    %17 = arith.addf %13, %16 : vector<32x1xf32>
    %18 = math.rsqrt %17 : vector<32x1xf32>
    %19 = vector.broadcast %18 : vector<32x1xf32> to vector<32x128xf32>
    %20 = arith.mulf %15, %19 : vector<32x128xf32>
    %21 = vector.broadcast %1 : vector<1x128xf32> to vector<32x128xf32>
    %22 = arith.mulf %20, %21 : vector<32x128xf32>
    %23 = vector.broadcast %2 : vector<1x128xf32> to vector<32x128xf32>
    %24 = arith.addf %22, %23 : vector<32x128xf32>
    %25 = arith.truncf %24 : vector<32x128xf32> to vector<32x128xbf16>
    %c0_9 = arith.constant 0 : index
    %c0_10 = arith.constant 0 : index
    %26 = vector.load %arg4[%c0_9, %c0_10] : memref<128x512xbf16, #tpu.memory_space<vmem>>, vector<128x512xbf16>
    %cst_11 = arith.constant dense<0.000000e+00> : vector<32x512xf32>
    %27 = tpu.matmul %25, %26, %cst_11 {dimension_numbers = #tpu.dot_dimension_numbers<[1], [0], [0], [1], [0, 0, 1, 1], [], []>} : vector<32x128xbf16>, vector<128x512xbf16>, vector<32x512xf32> -> vector<32x512xf32>
    %c0_12 = arith.constant 0 : index
    %c0_13 = arith.constant 0 : index
    %28 = vector.load %arg5[%c0_12, %c0_13] : memref<1x512xf32, #tpu.memory_space<vmem>>, vector<1x512xf32>
    %29 = vector.broadcast %28 : vector<1x512xf32> to vector<32x512xf32>
    %30 = arith.addf %27, %29 : vector<32x512xf32>
    %cst_14 = arith.constant 0.000000e+00 : f32
    %31 = vector.broadcast %cst_14 : f32 to vector<32x512xf32>
    %32 = arith.maximumf %30, %31 : vector<32x512xf32>
    %33 = arith.truncf %32 : vector<32x512xf32> to vector<32x512xbf16>
    %c0_15 = arith.constant 0 : index
    %c0_16 = arith.constant 0 : index
    %34 = vector.load %arg6[%c0_15, %c0_16] : memref<512x128xbf16, #tpu.memory_space<vmem>>, vector<512x128xbf16>
    %cst_17 = arith.constant dense<0.000000e+00> : vector<32x128xf32>
    %35 = tpu.matmul %33, %34, %cst_17 {dimension_numbers = #tpu.dot_dimension_numbers<[1], [0], [0], [1], [0, 0, 1, 1], [], []>} : vector<32x512xbf16>, vector<512x128xbf16>, vector<32x128xf32> -> vector<32x128xf32>
    %c0_18 = arith.constant 0 : index
    %c0_19 = arith.constant 0 : index
    %36 = vector.load %arg7[%c0_18, %c0_19] : memref<1x128xf32, #tpu.memory_space<vmem>>, vector<1x128xf32>
    %37 = vector.broadcast %36 : vector<1x128xf32> to vector<32x128xf32>
    %38 = arith.addf %35, %37 : vector<32x128xf32>
    %39 = arith.addf %0, %38 : vector<32x128xf32>
    %c0_20 = arith.constant 0 : index
    %c0_21 = arith.constant 0 : index
    %40 = vector.load %arg8[%c0_20, %c0_21] : memref<32x128xf32, #tpu.memory_space<vmem>>, vector<32x128xf32>
    tpu.vector_store %arg8[%c0_20, %c0_21], %39 {strides = array<i32>} : memref<32x128xf32, #tpu.memory_space<vmem>>, vector<32x128xf32>,
    return
  }
  func.func @transform_0(%arg0: i32) -> (i32, i32) {
    %c0_i32 = arith.constant 0 : i32
    %c0_i32_0 = arith.constant 0 : i32
    return %arg0, %c0_i32 : i32, i32
  }
  func.func @transform_1(%arg0: i32) -> (i32, i32) {
    %c0_i32 = arith.constant 0 : i32
    %c0_i32_0 = arith.constant 0 : i32
    %c0_i32_1 = arith.constant 0 : i32
    return %c0_i32, %c0_i32_0 : i32, i32
  }
  func.func @transform_2(%arg0: i32) -> (i32, i32) {
    %c0_i32 = arith.constant 0 : i32
    %c0_i32_0 = arith.constant 0 : i32
    %c0_i32_1 = arith.constant 0 : i32
    return %c0_i32, %c0_i32_0 : i32, i32
  }
  func.func @transform_3(%arg0: i32) -> (i32, i32) {
    %c0_i32 = arith.constant 0 : i32
    %c0_i32_0 = arith.constant 0 : i32
    %c0_i32_1 = arith.constant 0 : i32
    return %c0_i32, %c0_i32_0 : i32, i32
  }
  func.func @transform_4(%arg0: i32) -> (i32, i32) {
    %c0_i32 = arith.constant 0 : i32
    %c0_i32_0 = arith.constant 0 : i32
    %c0_i32_1 = arith.constant 0 : i32
    return %c0_i32, %c0_i32_0 : i32, i32
  }
  func.func @transform_5(%arg0: i32) -> (i32, i32) {
    %c0_i32 = arith.constant 0 : i32
    %c0_i32_0 = arith.constant 0 : i32
    %c0_i32_1 = arith.constant 0 : i32
    return %c0_i32, %c0_i32_0 : i32, i32
  }
  func.func @transform_6(%arg0: i32) -> (i32, i32) {
    %c0_i32 = arith.constant 0 : i32
    %c0_i32_0 = arith.constant 0 : i32
    %c0_i32_1 = arith.constant 0 : i32
    return %c0_i32, %c0_i32_0 : i32, i32
  }
  func.func @transform_7(%arg0: i32) -> (i32, i32) {
    %c0_i32 = arith.constant 0 : i32
    %c0_i32_0 = arith.constant 0 : i32
    return %arg0, %c0_i32 : i32, i32
  }
}

module attributes {stable_mosaic.version = 11 : i64} {
  func.func @_attn_block_kernel(%arg0: i32, %arg1: memref<1x16x128xf32, #tpu.memory_space<vmem>>, %arg2: memref<1x128xf32, #tpu.memory_space<vmem>>, %arg3: memref<1x128xf32, #tpu.memory_space<vmem>>, %arg4: memref<128x384xbf16, #tpu.memory_space<vmem>>, %arg5: memref<128x128xbf16, #tpu.memory_space<vmem>>, %arg6: memref<1x128xf32, #tpu.memory_space<vmem>>, %arg7: memref<1x16x128xf32, #tpu.memory_space<vmem>>) attributes {dimension_semantics = [#tpu.dimension_semantics<parallel>], iteration_bounds = array<i64: 2>, scalar_prefetch = 0 : i64, scratch_operands = 0 : i64, tpu.core_type = #tpu.core_type<tc>, window_params = [{transform_indices = @transform_0, window_bounds = array<i64: 1, 16, 128>}, {pipeline_mode = #tpu.pipeline_mode<synchronous>, transform_indices = @transform_1, window_bounds = array<i64: 1, 128>}, {pipeline_mode = #tpu.pipeline_mode<synchronous>, transform_indices = @transform_2, window_bounds = array<i64: 1, 128>}, {pipeline_mode = #tpu.pipeline_mode<synchronous>, transform_indices = @transform_3, window_bounds = array<i64: 128, 384>}, {pipeline_mode = #tpu.pipeline_mode<synchronous>, transform_indices = @transform_4, window_bounds = array<i64: 128, 128>}, {pipeline_mode = #tpu.pipeline_mode<synchronous>, transform_indices = @transform_5, window_bounds = array<i64: 1, 128>}, {transform_indices = @transform_6, window_bounds = array<i64: 1, 16, 128>}]} {
    %c0 = arith.constant 0 : index
    %c0_0 = arith.constant 0 : index
    %c0_1 = arith.constant 0 : index
    %0 = vector.load %arg1[%c0, %c0_0, %c0_1] : memref<1x16x128xf32, #tpu.memory_space<vmem>>, vector<1x16x128xf32>
    %1 = vector.shape_cast %0 : vector<1x16x128xf32> to vector<16x128xf32>
    %c0_2 = arith.constant 0 : index
    %c0_3 = arith.constant 0 : index
    %2 = vector.load %arg2[%c0_2, %c0_3] : memref<1x128xf32, #tpu.memory_space<vmem>>, vector<1x128xf32>
    %c0_4 = arith.constant 0 : index
    %c0_5 = arith.constant 0 : index
    %3 = vector.load %arg3[%c0_4, %c0_5] : memref<1x128xf32, #tpu.memory_space<vmem>>, vector<1x128xf32>
    %cst = arith.constant dense<0.000000e+00> : vector<16xf32>
    %4 = vector.multi_reduction <add>, %1, %cst [1] : vector<16x128xf32> to vector<16xf32>
    %5 = vector.shape_cast %4 : vector<16xf32> to vector<16x1xf32>
    %cst_6 = arith.constant 1.280000e+02 : f32
    %6 = vector.broadcast %cst_6 : f32 to vector<16x1xf32>
    %7 = arith.divf %5, %6 : vector<16x1xf32>
    %8 = vector.broadcast %7 : vector<16x1xf32> to vector<16x128xf32>
    %9 = arith.subf %1, %8 : vector<16x128xf32>
    %10 = arith.mulf %9, %9 : vector<16x128xf32>
    %cst_7 = arith.constant dense<0.000000e+00> : vector<16xf32>
    %11 = vector.multi_reduction <add>, %10, %cst_7 [1] : vector<16x128xf32> to vector<16xf32>
    %12 = vector.shape_cast %11 : vector<16xf32> to vector<16x1xf32>
    %cst_8 = arith.constant 1.280000e+02 : f32
    %13 = vector.broadcast %cst_8 : f32 to vector<16x1xf32>
    %14 = arith.divf %12, %13 : vector<16x1xf32>
    %15 = vector.broadcast %7 : vector<16x1xf32> to vector<16x128xf32>
    %16 = arith.subf %1, %15 : vector<16x128xf32>
    %cst_9 = arith.constant 9.99999974E-6 : f32
    %17 = vector.broadcast %cst_9 : f32 to vector<16x1xf32>
    %18 = arith.addf %14, %17 : vector<16x1xf32>
    %19 = math.rsqrt %18 : vector<16x1xf32>
    %20 = vector.broadcast %19 : vector<16x1xf32> to vector<16x128xf32>
    %21 = arith.mulf %16, %20 : vector<16x128xf32>
    %22 = vector.broadcast %2 : vector<1x128xf32> to vector<16x128xf32>
    %23 = arith.mulf %21, %22 : vector<16x128xf32>
    %24 = vector.broadcast %3 : vector<1x128xf32> to vector<16x128xf32>
    %25 = arith.addf %23, %24 : vector<16x128xf32>
    %26 = arith.truncf %25 : vector<16x128xf32> to vector<16x128xbf16>
    %c0_10 = arith.constant 0 : index
    %c0_11 = arith.constant 0 : index
    %27 = vector.load %arg4[%c0_10, %c0_11] : memref<128x384xbf16, #tpu.memory_space<vmem>>, vector<128x384xbf16>
    %cst_12 = arith.constant dense<0.000000e+00> : vector<16x384xf32>
    %28 = tpu.matmul %26, %27, %cst_12 {dimension_numbers = #tpu.dot_dimension_numbers<[1], [0], [0], [1], [0, 0, 1, 1], [], []>} : vector<16x128xbf16>, vector<128x384xbf16>, vector<16x384xf32> -> vector<16x384xf32>
    %29 = vector.extract_strided_slice %28 {offsets = [0, 0], sizes = [16, 128], strides = [1, 1]} : vector<16x384xf32> to vector<16x128xf32>
    %30 = arith.truncf %29 : vector<16x128xf32> to vector<16x128xbf16>
    %31 = vector.extract_strided_slice %28 {offsets = [0, 128], sizes = [16, 128], strides = [1, 1]} : vector<16x384xf32> to vector<16x128xf32>
    %32 = arith.truncf %31 : vector<16x128xf32> to vector<16x128xbf16>
    %33 = vector.extract_strided_slice %28 {offsets = [0, 256], sizes = [16, 128], strides = [1, 1]} : vector<16x384xf32> to vector<16x128xf32>
    %34 = arith.truncf %33 : vector<16x128xf32> to vector<16x128xbf16>
    %cst_13 = arith.constant 3.200000e+01 : f32
    %cst_14 = arith.constant -5.000000e-01 : f32
    %35 = math.powf %cst_13, %cst_14 : f32
    %36 = tpu.iota {dimensions = array<i32: 0>} : vector<16x16xi32>
    %37 = tpu.iota {dimensions = array<i32: 1>} : vector<16x16xi32>
    %38 = arith.cmpi sle, %37, %36 : vector<16x16xi32>
    %39 = vector.extract_strided_slice %30 {offsets = [0, 0], sizes = [16, 32], strides = [1, 1]} : vector<16x128xbf16> to vector<16x32xbf16>
    %40 = vector.extract_strided_slice %32 {offsets = [0, 0], sizes = [16, 32], strides = [1, 1]} : vector<16x128xbf16> to vector<16x32xbf16>
    %41 = vector.extract_strided_slice %34 {offsets = [0, 0], sizes = [16, 32], strides = [1, 1]} : vector<16x128xbf16> to vector<16x32xbf16>
    %cst_15 = arith.constant dense<0.000000e+00> : vector<16x16xf32>
    %42 = tpu.matmul %39, %40, %cst_15 {dimension_numbers = #tpu.dot_dimension_numbers<[1], [1], [0], [0], [0, 0, 1, 0], [], []>} : vector<16x32xbf16>, vector<16x32xbf16>, vector<16x16xf32> -> vector<16x16xf32>
    %43 = vector.broadcast %35 : f32 to vector<16x16xf32>
    %44 = arith.mulf %42, %43 : vector<16x16xf32>
    %cst_16 = arith.constant 0xFF800000 : f32
    %45 = vector.broadcast %cst_16 : f32 to vector<16x16xf32>
    %46 = arith.select %38, %44, %45 : vector<16x16xi1>, vector<16x16xf32>
    %cst_17 = arith.constant dense<0xFF800000> : vector<16xf32>
    %47 = vector.multi_reduction <maximumf>, %46, %cst_17 [1] : vector<16x16xf32> to vector<16xf32>
    %48 = vector.shape_cast %47 : vector<16xf32> to vector<16x1xf32>
    %49 = vector.broadcast %48 : vector<16x1xf32> to vector<16x16xf32>
    %50 = arith.subf %46, %49 : vector<16x16xf32>
    %51 = math.exp %50 : vector<16x16xf32>
    %cst_18 = arith.constant dense<0.000000e+00> : vector<16xf32>
    %52 = vector.multi_reduction <add>, %51, %cst_18 [1] : vector<16x16xf32> to vector<16xf32>
    %53 = vector.shape_cast %52 : vector<16xf32> to vector<16x1xf32>
    %54 = tpu.reciprocal %53 {approx = true} : vector<16x1xf32> -> vector<16x1xf32>
    %55 = vector.broadcast %54 : vector<16x1xf32> to vector<16x16xf32>
    %56 = arith.mulf %51, %55 : vector<16x16xf32>
    %57 = arith.truncf %56 : vector<16x16xf32> to vector<16x16xbf16>
    %cst_19 = arith.constant dense<0.000000e+00> : vector<16x32xf32>
    %58 = tpu.matmul %57, %41, %cst_19 {dimension_numbers = #tpu.dot_dimension_numbers<[1], [0], [0], [1], [0, 0, 1, 1], [], []>} : vector<16x16xbf16>, vector<16x32xbf16>, vector<16x32xf32> -> vector<16x32xf32>
    %59 = vector.extract_strided_slice %30 {offsets = [0, 32], sizes = [16, 32], strides = [1, 1]} : vector<16x128xbf16> to vector<16x32xbf16>
    %60 = vector.extract_strided_slice %32 {offsets = [0, 32], sizes = [16, 32], strides = [1, 1]} : vector<16x128xbf16> to vector<16x32xbf16>
    %61 = vector.extract_strided_slice %34 {offsets = [0, 32], sizes = [16, 32], strides = [1, 1]} : vector<16x128xbf16> to vector<16x32xbf16>
    %cst_20 = arith.constant dense<0.000000e+00> : vector<16x16xf32>
    %62 = tpu.matmul %59, %60, %cst_20 {dimension_numbers = #tpu.dot_dimension_numbers<[1], [1], [0], [0], [0, 0, 1, 0], [], []>} : vector<16x32xbf16>, vector<16x32xbf16>, vector<16x16xf32> -> vector<16x16xf32>
    %63 = vector.broadcast %35 : f32 to vector<16x16xf32>
    %64 = arith.mulf %62, %63 : vector<16x16xf32>
    %cst_21 = arith.constant 0xFF800000 : f32
    %65 = vector.broadcast %cst_21 : f32 to vector<16x16xf32>
    %66 = arith.select %38, %64, %65 : vector<16x16xi1>, vector<16x16xf32>
    %cst_22 = arith.constant dense<0xFF800000> : vector<16xf32>
    %67 = vector.multi_reduction <maximumf>, %66, %cst_22 [1] : vector<16x16xf32> to vector<16xf32>
    %68 = vector.shape_cast %67 : vector<16xf32> to vector<16x1xf32>
    %69 = vector.broadcast %68 : vector<16x1xf32> to vector<16x16xf32>
    %70 = arith.subf %66, %69 : vector<16x16xf32>
    %71 = math.exp %70 : vector<16x16xf32>
    %cst_23 = arith.constant dense<0.000000e+00> : vector<16xf32>
    %72 = vector.multi_reduction <add>, %71, %cst_23 [1] : vector<16x16xf32> to vector<16xf32>
    %73 = vector.shape_cast %72 : vector<16xf32> to vector<16x1xf32>
    %74 = tpu.reciprocal %73 {approx = true} : vector<16x1xf32> -> vector<16x1xf32>
    %75 = vector.broadcast %74 : vector<16x1xf32> to vector<16x16xf32>
    %76 = arith.mulf %71, %75 : vector<16x16xf32>
    %77 = arith.truncf %76 : vector<16x16xf32> to vector<16x16xbf16>
    %cst_24 = arith.constant dense<0.000000e+00> : vector<16x32xf32>
    %78 = tpu.matmul %77, %61, %cst_24 {dimension_numbers = #tpu.dot_dimension_numbers<[1], [0], [0], [1], [0, 0, 1, 1], [], []>} : vector<16x16xbf16>, vector<16x32xbf16>, vector<16x32xf32> -> vector<16x32xf32>
    %79 = vector.extract_strided_slice %30 {offsets = [0, 64], sizes = [16, 32], strides = [1, 1]} : vector<16x128xbf16> to vector<16x32xbf16>
    %80 = vector.extract_strided_slice %32 {offsets = [0, 64], sizes = [16, 32], strides = [1, 1]} : vector<16x128xbf16> to vector<16x32xbf16>
    %81 = vector.extract_strided_slice %34 {offsets = [0, 64], sizes = [16, 32], strides = [1, 1]} : vector<16x128xbf16> to vector<16x32xbf16>
    %cst_25 = arith.constant dense<0.000000e+00> : vector<16x16xf32>
    %82 = tpu.matmul %79, %80, %cst_25 {dimension_numbers = #tpu.dot_dimension_numbers<[1], [1], [0], [0], [0, 0, 1, 0], [], []>} : vector<16x32xbf16>, vector<16x32xbf16>, vector<16x16xf32> -> vector<16x16xf32>
    %83 = vector.broadcast %35 : f32 to vector<16x16xf32>
    %84 = arith.mulf %82, %83 : vector<16x16xf32>
    %cst_26 = arith.constant 0xFF800000 : f32
    %85 = vector.broadcast %cst_26 : f32 to vector<16x16xf32>
    %86 = arith.select %38, %84, %85 : vector<16x16xi1>, vector<16x16xf32>
    %cst_27 = arith.constant dense<0xFF800000> : vector<16xf32>
    %87 = vector.multi_reduction <maximumf>, %86, %cst_27 [1] : vector<16x16xf32> to vector<16xf32>
    %88 = vector.shape_cast %87 : vector<16xf32> to vector<16x1xf32>
    %89 = vector.broadcast %88 : vector<16x1xf32> to vector<16x16xf32>
    %90 = arith.subf %86, %89 : vector<16x16xf32>
    %91 = math.exp %90 : vector<16x16xf32>
    %cst_28 = arith.constant dense<0.000000e+00> : vector<16xf32>
    %92 = vector.multi_reduction <add>, %91, %cst_28 [1] : vector<16x16xf32> to vector<16xf32>
    %93 = vector.shape_cast %92 : vector<16xf32> to vector<16x1xf32>
    %94 = tpu.reciprocal %93 {approx = true} : vector<16x1xf32> -> vector<16x1xf32>
    %95 = vector.broadcast %94 : vector<16x1xf32> to vector<16x16xf32>
    %96 = arith.mulf %91, %95 : vector<16x16xf32>
    %97 = arith.truncf %96 : vector<16x16xf32> to vector<16x16xbf16>
    %cst_29 = arith.constant dense<0.000000e+00> : vector<16x32xf32>
    %98 = tpu.matmul %97, %81, %cst_29 {dimension_numbers = #tpu.dot_dimension_numbers<[1], [0], [0], [1], [0, 0, 1, 1], [], []>} : vector<16x16xbf16>, vector<16x32xbf16>, vector<16x32xf32> -> vector<16x32xf32>
    %99 = vector.extract_strided_slice %30 {offsets = [0, 96], sizes = [16, 32], strides = [1, 1]} : vector<16x128xbf16> to vector<16x32xbf16>
    %100 = vector.extract_strided_slice %32 {offsets = [0, 96], sizes = [16, 32], strides = [1, 1]} : vector<16x128xbf16> to vector<16x32xbf16>
    %101 = vector.extract_strided_slice %34 {offsets = [0, 96], sizes = [16, 32], strides = [1, 1]} : vector<16x128xbf16> to vector<16x32xbf16>
    %cst_30 = arith.constant dense<0.000000e+00> : vector<16x16xf32>
    %102 = tpu.matmul %99, %100, %cst_30 {dimension_numbers = #tpu.dot_dimension_numbers<[1], [1], [0], [0], [0, 0, 1, 0], [], []>} : vector<16x32xbf16>, vector<16x32xbf16>, vector<16x16xf32> -> vector<16x16xf32>
    %103 = vector.broadcast %35 : f32 to vector<16x16xf32>
    %104 = arith.mulf %102, %103 : vector<16x16xf32>
    %cst_31 = arith.constant 0xFF800000 : f32
    %105 = vector.broadcast %cst_31 : f32 to vector<16x16xf32>
    %106 = arith.select %38, %104, %105 : vector<16x16xi1>, vector<16x16xf32>
    %cst_32 = arith.constant dense<0xFF800000> : vector<16xf32>
    %107 = vector.multi_reduction <maximumf>, %106, %cst_32 [1] : vector<16x16xf32> to vector<16xf32>
    %108 = vector.shape_cast %107 : vector<16xf32> to vector<16x1xf32>
    %109 = vector.broadcast %108 : vector<16x1xf32> to vector<16x16xf32>
    %110 = arith.subf %106, %109 : vector<16x16xf32>
    %111 = math.exp %110 : vector<16x16xf32>
    %cst_33 = arith.constant dense<0.000000e+00> : vector<16xf32>
    %112 = vector.multi_reduction <add>, %111, %cst_33 [1] : vector<16x16xf32> to vector<16xf32>
    %113 = vector.shape_cast %112 : vector<16xf32> to vector<16x1xf32>
    %114 = tpu.reciprocal %113 {approx = true} : vector<16x1xf32> -> vector<16x1xf32>
    %115 = vector.broadcast %114 : vector<16x1xf32> to vector<16x16xf32>
    %116 = arith.mulf %111, %115 : vector<16x16xf32>
    %117 = arith.truncf %116 : vector<16x16xf32> to vector<16x16xbf16>
    %cst_34 = arith.constant dense<0.000000e+00> : vector<16x32xf32>
    %118 = tpu.matmul %117, %101, %cst_34 {dimension_numbers = #tpu.dot_dimension_numbers<[1], [0], [0], [1], [0, 0, 1, 1], [], []>} : vector<16x16xbf16>, vector<16x32xbf16>, vector<16x32xf32> -> vector<16x32xf32>
    %119 = tpu.concatenate %58, %78, %98, %118 in 1 : vector<16x32xf32>, vector<16x32xf32>, vector<16x32xf32>, vector<16x32xf32> -> vector<16x128xf32>
    %120 = arith.truncf %119 : vector<16x128xf32> to vector<16x128xbf16>
    %c0_35 = arith.constant 0 : index
    %c0_36 = arith.constant 0 : index
    %121 = vector.load %arg5[%c0_35, %c0_36] : memref<128x128xbf16, #tpu.memory_space<vmem>>, vector<128x128xbf16>
    %cst_37 = arith.constant dense<0.000000e+00> : vector<16x128xf32>
    %122 = tpu.matmul %120, %121, %cst_37 {dimension_numbers = #tpu.dot_dimension_numbers<[1], [0], [0], [1], [0, 0, 1, 1], [], []>} : vector<16x128xbf16>, vector<128x128xbf16>, vector<16x128xf32> -> vector<16x128xf32>
    %c0_38 = arith.constant 0 : index
    %c0_39 = arith.constant 0 : index
    %123 = vector.load %arg6[%c0_38, %c0_39] : memref<1x128xf32, #tpu.memory_space<vmem>>, vector<1x128xf32>
    %124 = vector.broadcast %123 : vector<1x128xf32> to vector<16x128xf32>
    %125 = arith.addf %122, %124 : vector<16x128xf32>
    %126 = arith.addf %1, %125 : vector<16x128xf32>
    %c0_40 = arith.constant 0 : index
    %c0_41 = arith.constant 0 : index
    %c0_42 = arith.constant 0 : index
    %127 = vector.load %arg7[%c0_40, %c0_41, %c0_42] : memref<1x16x128xf32, #tpu.memory_space<vmem>>, vector<1x16x128xf32>
    %128 = vector.shape_cast %127 : vector<1x16x128xf32> to vector<16x128xf32>
    %129 = vector.shape_cast %126 : vector<16x128xf32> to vector<1x16x128xf32>
    tpu.vector_store %arg7[%c0_40, %c0_41, %c0_42], %129 {strides = array<i32>} : memref<1x16x128xf32, #tpu.memory_space<vmem>>, vector<1x16x128xf32>,
    return
  }
  func.func @transform_0(%arg0: i32) -> (i32, i32, i32) {
    %c0_i32 = arith.constant 0 : i32
    %c0_i32_0 = arith.constant 0 : i32
    %c0_i32_1 = arith.constant 0 : i32
    return %arg0, %c0_i32, %c0_i32_0 : i32, i32, i32
  }
  func.func @transform_1(%arg0: i32) -> (i32, i32) {
    %c0_i32 = arith.constant 0 : i32
    %c0_i32_0 = arith.constant 0 : i32
    %c0_i32_1 = arith.constant 0 : i32
    return %c0_i32, %c0_i32_0 : i32, i32
  }
  func.func @transform_2(%arg0: i32) -> (i32, i32) {
    %c0_i32 = arith.constant 0 : i32
    %c0_i32_0 = arith.constant 0 : i32
    %c0_i32_1 = arith.constant 0 : i32
    return %c0_i32, %c0_i32_0 : i32, i32
  }
  func.func @transform_3(%arg0: i32) -> (i32, i32) {
    %c0_i32 = arith.constant 0 : i32
    %c0_i32_0 = arith.constant 0 : i32
    %c0_i32_1 = arith.constant 0 : i32
    return %c0_i32, %c0_i32_0 : i32, i32
  }
  func.func @transform_4(%arg0: i32) -> (i32, i32) {
    %c0_i32 = arith.constant 0 : i32
    %c0_i32_0 = arith.constant 0 : i32
    %c0_i32_1 = arith.constant 0 : i32
    return %c0_i32, %c0_i32_0 : i32, i32
  }
  func.func @transform_5(%arg0: i32) -> (i32, i32) {
    %c0_i32 = arith.constant 0 : i32
    %c0_i32_0 = arith.constant 0 : i32
    %c0_i32_1 = arith.constant 0 : i32
    return %c0_i32, %c0_i32_0 : i32, i32
  }
  func.func @transform_6(%arg0: i32) -> (i32, i32, i32) {
    %c0_i32 = arith.constant 0 : i32
    %c0_i32_0 = arith.constant 0 : i32
    %c0_i32_1 = arith.constant 0 : i32
    return %arg0, %c0_i32, %c0_i32_0 : i32, i32, i32
  }
}

module attributes {stable_mosaic.version = 11 : i64} {
  func.func @_lm_head_kernel(%arg0: i32, %arg1: memref<32x128xf32, #tpu.memory_space<vmem>>, %arg2: memref<1x128xf32, #tpu.memory_space<vmem>>, %arg3: memref<1x128xf32, #tpu.memory_space<vmem>>, %arg4: memref<128x128xbf16, #tpu.memory_space<vmem>>, %arg5: memref<1x128xf32, #tpu.memory_space<vmem>>, %arg6: memref<32x128xf32, #tpu.memory_space<vmem>>) attributes {dimension_semantics = [#tpu.dimension_semantics<parallel>], iteration_bounds = array<i64: 1>, scalar_prefetch = 0 : i64, scratch_operands = 0 : i64, tpu.core_type = #tpu.core_type<tc>, window_params = [{transform_indices = @transform_0, window_bounds = array<i64: 32, 128>}, {pipeline_mode = #tpu.pipeline_mode<synchronous>, transform_indices = @transform_1, window_bounds = array<i64: 1, 128>}, {pipeline_mode = #tpu.pipeline_mode<synchronous>, transform_indices = @transform_2, window_bounds = array<i64: 1, 128>}, {pipeline_mode = #tpu.pipeline_mode<synchronous>, transform_indices = @transform_3, window_bounds = array<i64: 128, 128>}, {pipeline_mode = #tpu.pipeline_mode<synchronous>, transform_indices = @transform_4, window_bounds = array<i64: 1, 128>}, {transform_indices = @transform_5, window_bounds = array<i64: 32, 128>}]} {
    %c0 = arith.constant 0 : index
    %c0_0 = arith.constant 0 : index
    %0 = vector.load %arg1[%c0, %c0_0] : memref<32x128xf32, #tpu.memory_space<vmem>>, vector<32x128xf32>
    %c0_1 = arith.constant 0 : index
    %c0_2 = arith.constant 0 : index
    %1 = vector.load %arg2[%c0_1, %c0_2] : memref<1x128xf32, #tpu.memory_space<vmem>>, vector<1x128xf32>
    %c0_3 = arith.constant 0 : index
    %c0_4 = arith.constant 0 : index
    %2 = vector.load %arg3[%c0_3, %c0_4] : memref<1x128xf32, #tpu.memory_space<vmem>>, vector<1x128xf32>
    %cst = arith.constant dense<0.000000e+00> : vector<32xf32>
    %3 = vector.multi_reduction <add>, %0, %cst [1] : vector<32x128xf32> to vector<32xf32>
    %4 = vector.shape_cast %3 : vector<32xf32> to vector<32x1xf32>
    %cst_5 = arith.constant 1.280000e+02 : f32
    %5 = vector.broadcast %cst_5 : f32 to vector<32x1xf32>
    %6 = arith.divf %4, %5 : vector<32x1xf32>
    %7 = vector.broadcast %6 : vector<32x1xf32> to vector<32x128xf32>
    %8 = arith.subf %0, %7 : vector<32x128xf32>
    %9 = arith.mulf %8, %8 : vector<32x128xf32>
    %cst_6 = arith.constant dense<0.000000e+00> : vector<32xf32>
    %10 = vector.multi_reduction <add>, %9, %cst_6 [1] : vector<32x128xf32> to vector<32xf32>
    %11 = vector.shape_cast %10 : vector<32xf32> to vector<32x1xf32>
    %cst_7 = arith.constant 1.280000e+02 : f32
    %12 = vector.broadcast %cst_7 : f32 to vector<32x1xf32>
    %13 = arith.divf %11, %12 : vector<32x1xf32>
    %14 = vector.broadcast %6 : vector<32x1xf32> to vector<32x128xf32>
    %15 = arith.subf %0, %14 : vector<32x128xf32>
    %cst_8 = arith.constant 9.99999974E-6 : f32
    %16 = vector.broadcast %cst_8 : f32 to vector<32x1xf32>
    %17 = arith.addf %13, %16 : vector<32x1xf32>
    %18 = math.rsqrt %17 : vector<32x1xf32>
    %19 = vector.broadcast %18 : vector<32x1xf32> to vector<32x128xf32>
    %20 = arith.mulf %15, %19 : vector<32x128xf32>
    %21 = vector.broadcast %1 : vector<1x128xf32> to vector<32x128xf32>
    %22 = arith.mulf %20, %21 : vector<32x128xf32>
    %23 = vector.broadcast %2 : vector<1x128xf32> to vector<32x128xf32>
    %24 = arith.addf %22, %23 : vector<32x128xf32>
    %25 = arith.truncf %24 : vector<32x128xf32> to vector<32x128xbf16>
    %c0_9 = arith.constant 0 : index
    %c0_10 = arith.constant 0 : index
    %26 = vector.load %arg4[%c0_9, %c0_10] : memref<128x128xbf16, #tpu.memory_space<vmem>>, vector<128x128xbf16>
    %cst_11 = arith.constant dense<0.000000e+00> : vector<32x128xf32>
    %27 = tpu.matmul %25, %26, %cst_11 {dimension_numbers = #tpu.dot_dimension_numbers<[1], [0], [0], [1], [0, 0, 1, 1], [], []>} : vector<32x128xbf16>, vector<128x128xbf16>, vector<32x128xf32> -> vector<32x128xf32>
    %c0_12 = arith.constant 0 : index
    %c0_13 = arith.constant 0 : index
    %28 = vector.load %arg5[%c0_12, %c0_13] : memref<1x128xf32, #tpu.memory_space<vmem>>, vector<1x128xf32>
    %29 = vector.broadcast %28 : vector<1x128xf32> to vector<32x128xf32>
    %30 = arith.addf %27, %29 : vector<32x128xf32>
    %c0_14 = arith.constant 0 : index
    %c0_15 = arith.constant 0 : index
    %31 = vector.load %arg6[%c0_14, %c0_15] : memref<32x128xf32, #tpu.memory_space<vmem>>, vector<32x128xf32>
    tpu.vector_store %arg6[%c0_14, %c0_15], %30 {strides = array<i32>} : memref<32x128xf32, #tpu.memory_space<vmem>>, vector<32x128xf32>,
    return
  }
  func.func @transform_0(%arg0: i32) -> (i32, i32) {
    %c0_i32 = arith.constant 0 : i32
    %c0_i32_0 = arith.constant 0 : i32
    return %arg0, %c0_i32 : i32, i32
  }
  func.func @transform_1(%arg0: i32) -> (i32, i32) {
    %c0_i32 = arith.constant 0 : i32
    %c0_i32_0 = arith.constant 0 : i32
    %c0_i32_1 = arith.constant 0 : i32
    return %c0_i32, %c0_i32_0 : i32, i32
  }
  func.func @transform_2(%arg0: i32) -> (i32, i32) {
    %c0_i32 = arith.constant 0 : i32
    %c0_i32_0 = arith.constant 0 : i32
    %c0_i32_1 = arith.constant 0 : i32
    return %c0_i32, %c0_i32_0 : i32, i32
  }
  func.func @transform_3(%arg0: i32) -> (i32, i32) {
    %c0_i32 = arith.constant 0 : i32
    %c0_i32_0 = arith.constant 0 : i32
    %c0_i32_1 = arith.constant 0 : i32
    return %c0_i32, %c0_i32_0 : i32, i32
  }
  func.func @transform_4(%arg0: i32) -> (i32, i32) {
    %c0_i32 = arith.constant 0 : i32
    %c0_i32_0 = arith.constant 0 : i32
    %c0_i32_1 = arith.constant 0 : i32
    return %c0_i32, %c0_i32_0 : i32, i32
  }
  func.func @transform_5(%arg0: i32) -> (i32, i32) {
    %c0_i32 = arith.constant 0 : i32
    %c0_i32_0 = arith.constant 0 : i32
    return %arg0, %c0_i32 : i32, i32
  }
}

</mosaic_0001>

<llo_original>
// kernel: gpt_forward.9
$region0: #{gpt_forward.9}
  #allocation0 [shape = 'u32[]', space=smem, size = 0x4, offset = 0x4, fixed_abs, tag = 'smem constant byte address 0x4 - core index']
  #allocation1 [shape = 'u32[144,128]{1,0:T(1,128)}', space=vmem, size = 0x12000, scoped, tag = 'internal scratch']
  %s0 = inlined_call_operand.vmem [shape: f32[32,128], index: 0, kind: input, shape index: {}]
  %s1 = inlined_call_operand.vmem [shape: f32[1,128], index: 1, kind: input, shape index: {}]
  %s2 = inlined_call_operand.vmem [shape: f32[1,128], index: 2, kind: input, shape index: {}, may-alias: {2,4}]
  %s3 = inlined_call_operand.vmem [shape: bf16[128,128], index: 3, kind: input, shape index: {}]
  %s4 = inlined_call_operand.vmem [shape: f32[1,128], index: 4, kind: input, shape index: {}, may-alias: {2,4}]
  %s5 = inlined_call_operand.hbm [shape: f32[32,128], index: 5, kind: output, shape index: {}]
  %s6 = sld [smem:[#allocation0]]
  $region30: #{gpt_forward.9} parent=0
    _
  %s8 = ssub.s32 1, %s6
  %s9 = scalar_select 0, %s8, %s6
  $region1: #{gpt_forward.9} parent=0
    #allocation2 [shape = 'u8[16384]{0}', space=vmem, size = 0x4000, scoped, tag = 'output window, operand 0, single buffered']
    #allocation3 [shape = 's32[1]{0}', space=sflag, size = 0x4, scoped, tag = 'scoped memory for gpt_forward.9']
    %10 = vsyncpa [#allocation3], 0
    // Predicated region
    $region2: #{gpt_forward.9} parent=1 // pred_check
      _
    $region3: #{gpt_forward.9} parent=1 // pred_check_branch
      %12 = sbr.rel (0) target = $region5
    $region4: #{gpt_forward.9} parent=1 // pred_region
      _
    $region5: #{gpt_forward.9} parent=1 // pred_fallthru
      _
    // Predicated region
    $region6: #{gpt_forward.9} parent=1 // pred_check
      _
    $region7: #{gpt_forward.9} parent=1 // pred_check_branch
      %14 = sbr.rel (0) target = $region9
    $region8: #{gpt_forward.9} parent=1 // pred_region
      _
    $region9: #{gpt_forward.9} parent=1 // pred_fallthru
      _
    // Predicated region
    $region10: #{gpt_forward.9} parent=1 // pred_check
      _
    $region11: #{gpt_forward.9} parent=1 // pred_check_branch
      %16 = sbr.rel (0) target = $region13
    $region12: #{gpt_forward.9} parent=1 // pred_region
      _
    $region13: #{gpt_forward.9} parent=1 // pred_fallthru
      _
    // Predicated region
    $region14: #{gpt_forward.9} parent=1 // pred_check
      _
    $region15: #{gpt_forward.9} parent=1 // pred_check_branch
      %18 = sbr.rel (0) target = $region17
    $region16: #{gpt_forward.9} parent=1 // pred_region
      _
    $region17: #{gpt_forward.9} parent=1 // pred_fallthru
      _
    // Predicated region
    $region18: #{gpt_forward.9} parent=1 // pred_check
      _
    $region19: #{gpt_forward.9} parent=1 // pred_check_branch
      %20 = sbr.rel (0) target = $region21
    $region20: #{gpt_forward.9} parent=1 // pred_region
      _
    $region21: #{gpt_forward.9} parent=1 // pred_fallthru
      _
    %v22 = vld [vmem:[%s0] sm:$0xff]
    %v23 = vld [vmem:[%s0 + $0x8] sm:$0xff]
    %v24 = vld [vmem:[%s0 + $0x10] sm:$0xff]
    %v25 = vld [vmem:[%s0 + $0x18] sm:$0xff]
    %v26 = vld [vmem:[%s1] sm:$0x1]
    %v27 = vld [vmem:[%s2] sm:$0x1]
    %28 = vadd.xlane.f32.xlu0 %v22
    %v29 = vpop.xlane.xlu0 %28
    %30 = vadd.xlane.f32.xlu0 %v23
    %v31 = vpop.xlane.xlu0 %30
    %32 = vadd.xlane.f32.xlu0 %v24
    %v33 = vpop.xlane.xlu0 %32
    %34 = vadd.xlane.f32.xlu0 %v25
    %v35 = vpop.xlane.xlu0 %34
    %v36 = vrcp.pop 128.0
    %v37 = vmul.f32 %v29, %v36
    %v38 = vmul.f32 %v31, %v36
    %v39 = vmul.f32 %v33, %v36
    %v40 = vmul.f32 %v35, %v36
    %v41 = vsub.f32 %v22, %v37
    %v42 = vsub.f32 %v23, %v38
    %v43 = vsub.f32 %v24, %v39
    %v44 = vsub.f32 %v25, %v40
    %v45 = vmul.f32 %v41, %v41
    %v46 = vmul.f32 %v42, %v42
    %v47 = vmul.f32 %v43, %v43
    %v48 = vmul.f32 %v44, %v44
    %49 = vadd.xlane.f32.xlu0 %v45
    %v50 = vpop.xlane.xlu0 %49
    %51 = vadd.xlane.f32.xlu0 %v46
    %v52 = vpop.xlane.xlu0 %51
    %53 = vadd.xlane.f32.xlu0 %v47
    %v54 = vpop.xlane.xlu0 %53
    %55 = vadd.xlane.f32.xlu0 %v48
    %v56 = vpop.xlane.xlu0 %55
    %v57 = vmul.f32 %v50, %v36
    %v58 = vmul.f32 %v52, %v36
    %v59 = vmul.f32 %v54, %v36
    %v60 = vmul.f32 %v56, %v36
    %v61 = vadd.f32 %v57, 1e-05
    %v62 = vadd.f32 %v58, 1e-05
    %v63 = vadd.f32 %v59, 1e-05
    %v64 = vadd.f32 %v60, 1e-05
    %v65 = vrsqrt.pop %v61
    %v66 = vrsqrt.pop %v62
    %v67 = vrsqrt.pop %v63
    %v68 = vrsqrt.pop %v64
    %v69 = vmul.f32 %v41, %v65
    %v70 = vmul.f32 %v42, %v66
    %v71 = vmul.f32 %v43, %v67
    %v72 = vmul.f32 %v44, %v68
    %v74 = vlaneseq
    %v75 = vshrl.u32 %v74, 7
    %v76 = vsub.s32 0, %v75
    %v77 = vrot.slane %v26, %v76
    %v79 = vmul.f32 %v69, %v77
    %v80 = vmul.f32 %v70, %v77
    %v81 = vmul.f32 %v71, %v77
    %v82 = vmul.f32 %v72, %v77
    %v84 = vlaneseq
    %v85 = vshrl.u32 %v84, 7
    %v86 = vsub.s32 0, %v85
    %v87 = vrot.slane %v27, %v86
    %v89 = vadd.f32 %v79, %v87
    %v90 = vadd.f32 %v80, %v87
    %v91 = vadd.f32 %v81, %v87
    %v92 = vadd.f32 %v82, %v87
    %v93 = vpack.c.bf16 %v90, %v89
    %v94 = vpack.c.bf16 %v92, %v91
    %v95 = vld [vmem:[%s3] sm:$0xf]
    %v96 = vld [vmem:[%s3 + $0x4] sm:$0xf]
    %v97 = vld [vmem:[%s3 + $0x8] sm:$0xf]
    %v98 = vld [vmem:[%s3 + $0xc] sm:$0xf]
    %v99 = vld [vmem:[%s3 + $0x10] sm:$0xf]
    %v100 = vld [vmem:[%s3 + $0x14] sm:$0xf]
    %v101 = vld [vmem:[%s3 + $0x18] sm:$0xf]
    %v102 = vld [vmem:[%s3 + $0x1c] sm:$0xf]
    %v103 = vld [vmem:[%s3 + $0x20] sm:$0xf]
    %v104 = vld [vmem:[%s3 + $0x24] sm:$0xf]
    %v105 = vld [vmem:[%s3 + $0x28] sm:$0xf]
    %v106 = vld [vmem:[%s3 + $0x2c] sm:$0xf]
    %v107 = vld [vmem:[%s3 + $0x30] sm:$0xf]
    %v108 = vld [vmem:[%s3 + $0x34] sm:$0xf]
    %v109 = vld [vmem:[%s3 + $0x38] sm:$0xf]
    %v110 = vld [vmem:[%s3 + $0x3c] sm:$0xf]
    %v111 = vld [vmem:[%s4] sm:$0x1]
    %v113 = vlaneseq
    %v114 = vshrl.u32 %v113, 7
    %v115 = vsub.s32 0, %v114
    %v116 = vrot.slane %v111, %v115
    %v134 = vunpack.c.l.b16 %v95
    %v135 = vunpack.c.l.b16 %v96
    %v136 = vunpack.c.l.b16 %v97
    %v137 = vunpack.c.l.b16 %v98
    %v138 = vunpack.c.l.b16 %v99
    %v139 = vunpack.c.l.b16 %v100
    %v140 = vunpack.c.l.b16 %v101
    %v141 = vunpack.c.l.b16 %v102
    %v142 = vunpack.c.l.b16 %v103
    %v143 = vunpack.c.l.b16 %v104
    %v144 = vunpack.c.l.b16 %v105
    %v145 = vunpack.c.l.b16 %v106
    %v146 = vunpack.c.l.b16 %v107
    %v147 = vunpack.c.l.b16 %v108
    %v148 = vunpack.c.l.b16 %v109
    %v149 = vunpack.c.l.b16 %v110
    %v150 = vpack.c.b16 %v135, %v134
    %v151 = vpack.c.b16 %v137, %v136
    %v152 = vpack.c.b16 %v139, %v138
    %v153 = vpack.c.b16 %v141, %v140
    %v154 = vpack.c.b16 %v143, %v142
    %v155 = vpack.c.b16 %v145, %v144
    %v156 = vpack.c.b16 %v147, %v146
    %v157 = vpack.c.b16 %v149, %v148
    %166 = vmatprep.subr.bf16.mxu0 0
    %167 = vmatpush1.bf16.msra.mxu0 %v150
    %168 = vmatprep.subr.bf16.mxu0 0
    %169 = vmatpush1.bf16.msra.mxu0 %v151
    %170 = vmatprep.subr.bf16.mxu0 0
    %171 = vmatpush1.bf16.msra.mxu0 %v152
    %172 = vmatprep.subr.bf16.mxu0 0
    %173 = vmatpush1.bf16.msra.mxu0 %v153
    %174 = vmatprep.subr.bf16.mxu0 0
    %175 = vmatpush1.bf16.msra.mxu0 %v154
    %176 = vmatprep.subr.bf16.mxu0 0
    %177 = vmatpush1.bf16.msra.mxu0 %v155
    %178 = vmatprep.subr.bf16.mxu0 0
    %179 = vmatpush1.bf16.msra.mxu0 %v156
    %180 = vmatprep.subr.bf16.mxu0 0
    %181 = vmatpush1.bf16.msra.mxu0 %v157
    %182 = vmatprep.subr.bf16.mxu0 0
    %183 = vmatpush1.bf16.msra.mxu0 0
    %184 = vmatprep.subr.bf16.mxu0 0
    %185 = vmatpush1.bf16.msra.mxu0 0
    %186 = vmatprep.subr.bf16.mxu0 0
    %187 = vmatpush1.bf16.msra.mxu0 0
    %188 = vmatprep.subr.bf16.mxu0 0
    %189 = vmatpush1.bf16.msra.mxu0 0
    %190 = vmatprep.subr.bf16.mxu0 0
    %191 = vmatpush1.bf16.msra.mxu0 0
    %192 = vmatprep.subr.bf16.mxu0 0
    %193 = vmatpush1.bf16.msra.mxu0 0
    %194 = vmatprep.subr.bf16.mxu0 0
    %195 = vmatpush1.bf16.msra.mxu0 0
    %196 = vmatprep.subr.bf16.mxu0 0
    %197 = vmatpush1.bf16.msra.mxu0 0
    %198 = vmatprep.mubr.bf16.mxu0 0
    %199 = vmatmul.mubr.bf16.gmra.mrb[0].mxu0 %v93
    %v200 = vpop.f32.mrb[0].mxu0
    %v201 = vadd.f32 %v116, %v200
    %v202 = vpop.f32.mrb[0].mxu0
    %v203 = vpop.f32.mrb[0].mxu0
    %v204 = vadd.f32 %v116, %v203
    %v205 = vpop.f32.mrb[0].mxu0
    %206 = vmatprep.mubr.bf16.mxu0 0
    %207 = vmatmul.mubr.bf16.gmra.mrb[0].mxu0 %v94
    %v208 = vpop.f32.mrb[0].mxu0
    %v209 = vadd.f32 %v116, %v208
    %v210 = vpop.f32.mrb[0].mxu0
    %v211 = vpop.f32.mrb[0].mxu0
    %v212 = vadd.f32 %v116, %v211
    %v213 = vpop.f32.mrb[0].mxu0
    %214 = vdwg.mxu0
    %215 = vst [vmem:[#allocation2] sm:$0xff] %v201
    %216 = vst [vmem:[#allocation2 + $0x8] sm:$0xff] %v204
    %217 = vst [vmem:[#allocation2 + $0x10] sm:$0xff] %v209
    %218 = vst [vmem:[#allocation2 + $0x18] sm:$0xff] %v212
    // Predicated region
    $region22: #{gpt_forward.9} parent=1 // pred_check
      _
    $region23: #{gpt_forward.9} parent=1 // pred_check_branch
      %220 = sbr.rel (0) target = $region25
    $region24: #{gpt_forward.9} parent=1 // pred_region
      %s222 = ssub.s32 512, 512
      %223 = vsyncadd [#allocation3], %s222
      %s224 = sshll.u32 [#allocation2], 4
      %s225 = int_to_ptr.vmem [resolvable:$true] %s224
      %230 = dma.vmem_to_hbm [thread:$0]  %s225, 512, %s5, [#allocation3], 128, 128, 8
    $region25: #{gpt_forward.9} parent=1 // pred_fallthru
      _
    // Predicated region
    $region26: #{gpt_forward.9} parent=1 // pred_check
      _
    $region27: #{gpt_forward.9} parent=1 // pred_check_branch
      %232 = sbr.rel (0) target = $region29
    $region28: #{gpt_forward.9} parent=1 // pred_region
      %233 = dma.done [#allocation3], 512
    $region29: #{gpt_forward.9} parent=1 // pred_fallthru
      _
    %234 = vsyncpa [#allocation3], 1

// kernel: gpt_forward.6
$region0: #{gpt_forward.6}
  #allocation0 [shape = 'u32[]', space=smem, size = 0x4, offset = 0x4, fixed_abs, tag = 'smem constant byte address 0x4 - core index']
  #allocation1 [shape = 'u32[144,128]{1,0:T(1,128)}', space=vmem, size = 0x12000, scoped, tag = 'internal scratch']
  %s0 = inlined_call_operand.vmem [shape: f32[32,128], index: 0, kind: input, shape index: {}]
  %s1 = inlined_call_operand.vmem [shape: f32[1,128], index: 1, kind: input, shape index: {}]
  %s2 = inlined_call_operand.vmem [shape: f32[1,128], index: 2, kind: input, shape index: {}, may-alias: {2,6}]
  %s3 = inlined_call_operand.vmem [shape: bf16[128,512], index: 3, kind: input, shape index: {}]
  %s4 = inlined_call_operand.vmem [shape: f32[1,512], index: 4, kind: input, shape index: {}]
  %s5 = inlined_call_operand.vmem [shape: bf16[512,128], index: 5, kind: input, shape index: {}]
  %s6 = inlined_call_operand.vmem [shape: f32[1,128], index: 6, kind: input, shape index: {}, may-alias: {2,6}]
  %s7 = inlined_call_operand.vmem [shape: f32[32,128], index: 7, kind: output, shape index: {}]
  %s8 = sld [smem:[#allocation0]]
  $region38: #{gpt_forward.6} parent=0
    _
  %s10 = ssub.s32 1, %s8
  %s11 = scalar_select 0, %s10, %s8
  // Predicated region
  $region2: #{gpt_forward.6} parent=0 // pred_check
    _
  $region3: #{gpt_forward.6} parent=0 // pred_check_branch
    %13 = sbr.rel (0) target = $region5
  $region4: #{gpt_forward.6} parent=0 // pred_region
    _
  $region5: #{gpt_forward.6} parent=0 // pred_fallthru
    _
  // Predicated region
  $region6: #{gpt_forward.6} parent=0 // pred_check
    _
  $region7: #{gpt_forward.6} parent=0 // pred_check_branch
    %15 = sbr.rel (0) target = $region9
  $region8: #{gpt_forward.6} parent=0 // pred_region
    _
  $region9: #{gpt_forward.6} parent=0 // pred_fallthru
    _
  // Predicated region
  $region10: #{gpt_forward.6} parent=0 // pred_check
    _
  $region11: #{gpt_forward.6} parent=0 // pred_check_branch
    %17 = sbr.rel (0) target = $region13
  $region12: #{gpt_forward.6} parent=0 // pred_region
    _
  $region13: #{gpt_forward.6} parent=0 // pred_fallthru
    _
  // Predicated region
  $region14: #{gpt_forward.6} parent=0 // pred_check
    _
  $region15: #{gpt_forward.6} parent=0 // pred_check_branch
    %19 = sbr.rel (0) target = $region17
  $region16: #{gpt_forward.6} parent=0 // pred_region
    _
  $region17: #{gpt_forward.6} parent=0 // pred_fallthru
    _
  // Predicated region
  $region18: #{gpt_forward.6} parent=0 // pred_check
    _
  $region19: #{gpt_forward.6} parent=0 // pred_check_branch
    %21 = sbr.rel (0) target = $region21
  $region20: #{gpt_forward.6} parent=0 // pred_region
    _
  $region21: #{gpt_forward.6} parent=0 // pred_fallthru
    _
  // Predicated region
  $region22: #{gpt_forward.6} parent=0 // pred_check
    _
  $region23: #{gpt_forward.6} parent=0 // pred_check_branch
    %23 = sbr.rel (0) target = $region25
  $region24: #{gpt_forward.6} parent=0 // pred_region
    _
  $region25: #{gpt_forward.6} parent=0 // pred_fallthru
    _
  // Predicated region
  $region26: #{gpt_forward.6} parent=0 // pred_check
    _
  $region27: #{gpt_forward.6} parent=0 // pred_check_branch
    %25 = sbr.rel (0) target = $region29
  $region28: #{gpt_forward.6} parent=0 // pred_region
    _
  $region29: #{gpt_forward.6} parent=0 // pred_fallthru
    _
  %v27 = vld [vmem:[%s0] sm:$0xff]
  %v28 = vld [vmem:[%s0 + $0x8] sm:$0xff]
  %v29 = vld [vmem:[%s0 + $0x10] sm:$0xff]
  %v30 = vld [vmem:[%s0 + $0x18] sm:$0xff]
  %v31 = vld [vmem:[%s1] sm:$0x1]
  %v32 = vld [vmem:[%s2] sm:$0x1]
  %33 = vadd.xlane.f32.xlu0 %v27
  %v34 = vpop.xlane.xlu0 %33
  %35 = vadd.xlane.f32.xlu0 %v28
  %v36 = vpop.xlane.xlu0 %35
  %37 = vadd.xlane.f32.xlu0 %v29
  %v38 = vpop.xlane.xlu0 %37
  %39 = vadd.xlane.f32.xlu0 %v30
  %v40 = vpop.xlane.xlu0 %39
  %v41 = vrcp.pop 128.0
  %v42 = vmul.f32 %v34, %v41
  %v43 = vmul.f32 %v36, %v41
  %v44 = vmul.f32 %v38, %v41
  %v45 = vmul.f32 %v40, %v41
  %v46 = vsub.f32 %v27, %v42
  %v47 = vsub.f32 %v28, %v43
  %v48 = vsub.f32 %v29, %v44
  %v49 = vsub.f32 %v30, %v45
  %v50 = vmul.f32 %v46, %v46
  %v51 = vmul.f32 %v47, %v47
  %v52 = vmul.f32 %v48, %v48
  %v53 = vmul.f32 %v49, %v49
  %54 = vadd.xlane.f32.xlu0 %v50
  %v55 = vpop.xlane.xlu0 %54
  %56 = vadd.xlane.f32.xlu0 %v51
  %v57 = vpop.xlane.xlu0 %56
  %58 = vadd.xlane.f32.xlu0 %v52
  %v59 = vpop.xlane.xlu0 %58
  %60 = vadd.xlane.f32.xlu0 %v53
  %v61 = vpop.xlane.xlu0 %60
  %v62 = vmul.f32 %v55, %v41
  %v63 = vmul.f32 %v57, %v41
  %v64 = vmul.f32 %v59, %v41
  %v65 = vmul.f32 %v61, %v41
  %v66 = vadd.f32 %v62, 1e-05
  %v67 = vadd.f32 %v63, 1e-05
  %v68 = vadd.f32 %v64, 1e-05
  %v69 = vadd.f32 %v65, 1e-05
  %v70 = vrsqrt.pop %v66
  %v71 = vrsqrt.pop %v67
  %v72 = vrsqrt.pop %v68
  %v73 = vrsqrt.pop %v69
  %v74 = vmul.f32 %v46, %v70
  %v75 = vmul.f32 %v47, %v71
  %v76 = vmul.f32 %v48, %v72
  %v77 = vmul.f32 %v49, %v73
  %v79 = vlaneseq
  %v80 = vshrl.u32 %v79, 7
  %v81 = vsub.s32 0, %v80
  %v82 = vrot.slane %v31, %v81
  %v84 = vmul.f32 %v74, %v82
  %v85 = vmul.f32 %v75, %v82
  %v86 = vmul.f32 %v76, %v82
  %v87 = vmul.f32 %v77, %v82
  %v89 = vlaneseq
  %v90 = vshrl.u32 %v89, 7
  %v91 = vsub.s32 0, %v90
  %v92 = vrot.slane %v32, %v91
  %v94 = vadd.f32 %v84, %v92
  %v95 = vadd.f32 %v85, %v92
  %v96 = vadd.f32 %v86, %v92
  %v97 = vadd.f32 %v87, %v92
  %v98 = vpack.c.bf16 %v95, %v94
  %v99 = vpack.c.bf16 %v97, %v96
  %v100 = vld [vmem:[%s3] sm:$0xff]
  %v101 = vld [vmem:[%s3 + $0x8] sm:$0xff]
  %v102 = vld [vmem:[%s3 + $0x10] sm:$0xff]
  %v103 = vld [vmem:[%s3 + $0x18] sm:$0xff]
  %v104 = vld [vmem:[%s3 + $0x20] sm:$0xff]
  %v105 = vld [vmem:[%s3 + $0x28] sm:$0xff]
  %v106 = vld [vmem:[%s3 + $0x30] sm:$0xff]
  %v107 = vld [vmem:[%s3 + $0x38] sm:$0xff]
  %v108 = vld [vmem:[%s3 + $0x40] sm:$0xff]
  %v109 = vld [vmem:[%s3 + $0x48] sm:$0xff]
  %v110 = vld [vmem:[%s3 + $0x50] sm:$0xff]
  %v111 = vld [vmem:[%s3 + $0x58] sm:$0xff]
  %v112 = vld [vmem:[%s3 + $0x60] sm:$0xff]
  %v113 = vld [vmem:[%s3 + $0x68] sm:$0xff]
  %v114 = vld [vmem:[%s3 + $0x70] sm:$0xff]
  %v115 = vld [vmem:[%s3 + $0x78] sm:$0xff]
  %v116 = vld [vmem:[%s3 + $0x80] sm:$0xff]
  %v117 = vld [vmem:[%s3 + $0x88] sm:$0xff]
  %v118 = vld [vmem:[%s3 + $0x90] sm:$0xff]
  %v119 = vld [vmem:[%s3 + $0x98] sm:$0xff]
  %v120 = vld [vmem:[%s3 + $0xa0] sm:$0xff]
  %v121 = vld [vmem:[%s3 + $0xa8] sm:$0xff]
  %v122 = vld [vmem:[%s3 + $0xb0] sm:$0xff]
  %v123 = vld [vmem:[%s3 + $0xb8] sm:$0xff]
  %v124 = vld [vmem:[%s3 + $0xc0] sm:$0xff]
  %v125 = vld [vmem:[%s3 + $0xc8] sm:$0xff]
  %v126 = vld [vmem:[%s3 + $0xd0] sm:$0xff]
  %v127 = vld [vmem:[%s3 + $0xd8] sm:$0xff]
  %v128 = vld [vmem:[%s3 + $0xe0] sm:$0xff]
  %v129 = vld [vmem:[%s3 + $0xe8] sm:$0xff]
  %v130 = vld [vmem:[%s3 + $0xf0] sm:$0xff]
  %v131 = vld [vmem:[%s3 + $0xf8] sm:$0xff]
  %v132 = vld [vmem:[%s4] sm:$0xf]
  %v134 = vlaneseq
  %v135 = vshrl.u32 %v134, 7
  %v136 = vsub.s32 0, %v135
  %v137 = vrot.slane %v132, %v136
  %v138 = vlaneseq
  %v139 = vshrl.u32 %v138, 7
  %v140 = vsub.s32 1, %v139
  %v141 = vrot.slane %v132, %v140
  %v142 = vlaneseq
  %v143 = vshrl.u32 %v142, 7
  %v144 = vsub.s32 2, %v143
  %v145 = vrot.slane %v132, %v144
  %v146 = vlaneseq
  %v147 = vshrl.u32 %v146, 7
  %v148 = vsub.s32 3, %v147
  %v149 = vrot.slane %v132, %v148
  %v186 = vunpack.c.l.b16 %v100
  %v187 = vunpack.c.h.b16 %v100
  %v188 = vunpack.c.l.b16 %v101
  %v189 = vunpack.c.h.b16 %v101
  %v190 = vunpack.c.l.b16 %v102
  %v191 = vunpack.c.h.b16 %v102
  %v192 = vunpack.c.l.b16 %v103
  %v193 = vunpack.c.h.b16 %v103
  %v194 = vunpack.c.l.b16 %v104
  %v195 = vunpack.c.h.b16 %v104
  %v196 = vunpack.c.l.b16 %v105
  %v197 = vunpack.c.h.b16 %v105
  %v198 = vunpack.c.l.b16 %v106
  %v199 = vunpack.c.h.b16 %v106
  %v200 = vunpack.c.l.b16 %v107
  %v201 = vunpack.c.h.b16 %v107
  %v202 = vunpack.c.l.b16 %v108
  %v203 = vunpack.c.h.b16 %v108
  %v204 = vunpack.c.l.b16 %v109
  %v205 = vunpack.c.h.b16 %v109
  %v206 = vunpack.c.l.b16 %v110
  %v207 = vunpack.c.h.b16 %v110
  %v208 = vunpack.c.l.b16 %v111
  %v209 = vunpack.c.h.b16 %v111
  %v210 = vunpack.c.l.b16 %v112
  %v211 = vunpack.c.h.b16 %v112
  %v212 = vunpack.c.l.b16 %v113
  %v213 = vunpack.c.h.b16 %v113
  %v214 = vunpack.c.l.b16 %v114
  %v215 = vunpack.c.h.b16 %v114
  %v216 = vunpack.c.l.b16 %v115
  %v217 = vunpack.c.h.b16 %v115
  %v218 = vunpack.c.l.b16 %v116
  %v219 = vunpack.c.h.b16 %v116
  %v220 = vunpack.c.l.b16 %v117
  %v221 = vunpack.c.h.b16 %v117
  %v222 = vunpack.c.l.b16 %v118
  %v223 = vunpack.c.h.b16 %v118
  %v224 = vunpack.c.l.b16 %v119
  %v225 = vunpack.c.h.b16 %v119
  %v226 = vunpack.c.l.b16 %v120
  %v227 = vunpack.c.h.b16 %v120
  %v228 = vunpack.c.l.b16 %v121
  %v229 = vunpack.c.h.b16 %v121
  %v230 = vunpack.c.l.b16 %v122
  %v231 = vunpack.c.h.b16 %v122
  %v232 = vunpack.c.l.b16 %v123
  %v233 = vunpack.c.h.b16 %v123
  %v234 = vunpack.c.l.b16 %v124
  %v235 = vunpack.c.h.b16 %v124
  %v236 = vunpack.c.l.b16 %v125
  %v237 = vunpack.c.h.b16 %v125
  %v238 = vunpack.c.l.b16 %v126
  %v239 = vunpack.c.h.b16 %v126
  %v240 = vunpack.c.l.b16 %v127
  %v241 = vunpack.c.h.b16 %v127
  %v242 = vunpack.c.l.b16 %v128
  %v243 = vunpack.c.h.b16 %v128
  %v244 = vunpack.c.l.b16 %v129
  %v245 = vunpack.c.h.b16 %v129
  %v246 = vunpack.c.l.b16 %v130
  %v247 = vunpack.c.h.b16 %v130
  %v248 = vunpack.c.l.b16 %v131
  %v249 = vunpack.c.h.b16 %v131
  %v250 = vpack.c.b16 %v190, %v186
  %v251 = vpack.c.b16 %v191, %v187
  %v252 = vpack.c.b16 %v192, %v188
  %v253 = vpack.c.b16 %v193, %v189
  %v254 = vpack.c.b16 %v198, %v194
  %v255 = vpack.c.b16 %v199, %v195
  %v256 = vpack.c.b16 %v200, %v196
  %v257 = vpack.c.b16 %v201, %v197
  %v258 = vpack.c.b16 %v206, %v202
  %v259 = vpack.c.b16 %v207, %v203
  %v260 = vpack.c.b16 %v208, %v204
  %v261 = vpack.c.b16 %v209, %v205
  %v262 = vpack.c.b16 %v214, %v210
  %v263 = vpack.c.b16 %v215, %v211
  %v264 = vpack.c.b16 %v216, %v212
  %v265 = vpack.c.b16 %v217, %v213
  %v266 = vpack.c.b16 %v222, %v218
  %v267 = vpack.c.b16 %v223, %v219
  %v268 = vpack.c.b16 %v224, %v220
  %v269 = vpack.c.b16 %v225, %v221
  %v270 = vpack.c.b16 %v230, %v226
  %v271 = vpack.c.b16 %v231, %v227
  %v272 = vpack.c.b16 %v232, %v228
  %v273 = vpack.c.b16 %v233, %v229
  %v274 = vpack.c.b16 %v238, %v234
  %v275 = vpack.c.b16 %v239, %v235
  %v276 = vpack.c.b16 %v240, %v236
  %v277 = vpack.c.b16 %v241, %v237
  %v278 = vpack.c.b16 %v246, %v242
  %v279 = vpack.c.b16 %v247, %v243
  %v280 = vpack.c.b16 %v248, %v244
  %v281 = vpack.c.b16 %v249, %v245
  %314 = vmatprep.subr.bf16.mxu0 %v251
  %315 = vmatpush1.bf16.msra.mxu0 %v250
  %316 = vmatprep.subr.bf16.mxu0 %v255
  %317 = vmatpush1.bf16.msra.mxu0 %v254
  %318 = vmatprep.subr.bf16.mxu0 %v259
  %319 = vmatpush1.bf16.msra.mxu0 %v258
  %320 = vmatprep.subr.bf16.mxu0 %v263
  %321 = vmatpush1.bf16.msra.mxu0 %v262
  %322 = vmatprep.subr.bf16.mxu0 %v267
  %323 = vmatpush1.bf16.msra.mxu0 %v266
  %324 = vmatprep.subr.bf16.mxu0 %v271
  %325 = vmatpush1.bf16.msra.mxu0 %v270
  %326 = vmatprep.subr.bf16.mxu0 %v275
  %327 = vmatpush1.bf16.msra.mxu0 %v274
  %328 = vmatprep.subr.bf16.mxu0 %v279
  %329 = vmatpush1.bf16.msra.mxu0 %v278
  %330 = vmatprep.subr.bf16.mxu0 0
  %331 = vmatpush1.bf16.msra.mxu0 0
  %332 = vmatprep.subr.bf16.mxu0 0
  %333 = vmatpush1.bf16.msra.mxu0 0
  %334 = vmatprep.subr.bf16.mxu0 0
  %335 = vmatpush1.bf16.msra.mxu0 0
  %336 = vmatprep.subr.bf16.mxu0 0
  %337 = vmatpush1.bf16.msra.mxu0 0
  %338 = vmatprep.subr.bf16.mxu0 0
  %339 = vmatpush1.bf16.msra.mxu0 0
  %340 = vmatprep.subr.bf16.mxu0 0
  %341 = vmatpush1.bf16.msra.mxu0 0
  %342 = vmatprep.subr.bf16.mxu0 0
  %343 = vmatpush1.bf16.msra.mxu0 0
  %344 = vmatprep.subr.bf16.mxu0 0
  %345 = vmatpush1.bf16.msra.mxu0 0
  %346 = vmatprep.mubr.bf16.mxu0 0
  %347 = vmatmul.mubr.bf16.gmra.mrb[0].mxu0 %v98
  %v348 = vpop.f32.mrb[0].mxu0
  %v349 = vadd.f32 %v137, %v348
  %v350 = vpop.f32.mrb[0].mxu0
  %v351 = vadd.f32 %v141, %v350
  %v352 = vpop.f32.mrb[0].mxu0
  %v353 = vadd.f32 %v137, %v352
  %v354 = vpop.f32.mrb[0].mxu0
  %v355 = vadd.f32 %v141, %v354
  %356 = vmatprep.mubr.bf16.mxu0 0
  %357 = vmatmul.mubr.bf16.gmra.mrb[0].mxu0 %v99
  %v358 = vpop.f32.mrb[0].mxu0
  %v359 = vadd.f32 %v137, %v358
  %v360 = vpop.f32.mrb[0].mxu0
  %v361 = vadd.f32 %v141, %v360
  %v362 = vpop.f32.mrb[0].mxu0
  %v363 = vadd.f32 %v137, %v362
  %v364 = vpop.f32.mrb[0].mxu0
  %v365 = vadd.f32 %v141, %v364
  %366 = vdwg.mxu0
  %367 = vmatprep.subr.bf16.mxu0 %v253
  %368 = vmatpush1.bf16.msra.mxu0 %v252
  %369 = vmatprep.subr.bf16.mxu0 %v257
  %370 = vmatpush1.bf16.msra.mxu0 %v256
  %371 = vmatprep.subr.bf16.mxu0 %v261
  %372 = vmatpush1.bf16.msra.mxu0 %v260
  %373 = vmatprep.subr.bf16.mxu0 %v265
  %374 = vmatpush1.bf16.msra.mxu0 %v264
  %375 = vmatprep.subr.bf16.mxu0 %v269
  %376 = vmatpush1.bf16.msra.mxu0 %v268
  %377 = vmatprep.subr.bf16.mxu0 %v273
  %378 = vmatpush1.bf16.msra.mxu0 %v272
  %379 = vmatprep.subr.bf16.mxu0 %v277
  %380 = vmatpush1.bf16.msra.mxu0 %v276
  %381 = vmatprep.subr.bf16.mxu0 %v281
  %382 = vmatpush1.bf16.msra.mxu0 %v280
  %383 = vmatprep.subr.bf16.mxu0 0
  %384 = vmatpush1.bf16.msra.mxu0 0
  %385 = vmatprep.subr.bf16.mxu0 0
  %386 = vmatpush1.bf16.msra.mxu0 0
  %387 = vmatprep.subr.bf16.mxu0 0
  %388 = vmatpush1.bf16.msra.mxu0 0
  %389 = vmatprep.subr.bf16.mxu0 0
  %390 = vmatpush1.bf16.msra.mxu0 0
  %391 = vmatprep.subr.bf16.mxu0 0
  %392 = vmatpush1.bf16.msra.mxu0 0
  %393 = vmatprep.subr.bf16.mxu0 0
  %394 = vmatpush1.bf16.msra.mxu0 0
  %395 = vmatprep.subr.bf16.mxu0 0
  %396 = vmatpush1.bf16.msra.mxu0 0
  %397 = vmatprep.subr.bf16.mxu0 0
  %398 = vmatpush1.bf16.msra.mxu0 0
  %399 = vmatprep.mubr.bf16.mxu0 0
  %400 = vmatmul.mubr.bf16.gmra.mrb[0].mxu0 %v98
  %v401 = vpop.f32.mrb[0].mxu0
  %v402 = vadd.f32 %v145, %v401
  %v403 = vpop.f32.mrb[0].mxu0
  %v404 = vadd.f32 %v149, %v403
  %v405 = vpop.f32.mrb[0].mxu0
  %v406 = vadd.f32 %v145, %v405
  %v407 = vpop.f32.mrb[0].mxu0
  %v408 = vadd.f32 %v149, %v407
  %409 = vmatprep.mubr.bf16.mxu0 0
  %410 = vmatmul.mubr.bf16.gmra.mrb[0].mxu0 %v99
  %v411 = vpop.f32.mrb[0].mxu0
  %v412 = vadd.f32 %v145, %v411
  %v413 = vpop.f32.mrb[0].mxu0
  %v414 = vadd.f32 %v149, %v413
  %v415 = vpop.f32.mrb[0].mxu0
  %v416 = vadd.f32 %v145, %v415
  %v417 = vpop.f32.mrb[0].mxu0
  %v418 = vadd.f32 %v149, %v417
  %419 = vdwg.mxu0
  %v420 = vmax.f32 %v349, 0.0
  %v421 = vmax.f32 %v351, 0.0
  %v422 = vmax.f32 %v402, 0.0
  %v423 = vmax.f32 %v404, 0.0
  %v424 = vmax.f32 %v353, 0.0
  %v425 = vmax.f32 %v355, 0.0
  %v426 = vmax.f32 %v406, 0.0
  %v427 = vmax.f32 %v408, 0.0
  %v428 = vmax.f32 %v359, 0.0
  %v429 = vmax.f32 %v361, 0.0
  %v430 = vmax.f32 %v412, 0.0
  %v431 = vmax.f32 %v414, 0.0
  %v432 = vmax.f32 %v363, 0.0
  %v433 = vmax.f32 %v365, 0.0
  %v434 = vmax.f32 %v416, 0.0
  %v435 = vmax.f32 %v418, 0.0
  %v436 = vpack.c.bf16 %v424, %v420
  %v437 = vpack.c.bf16 %v425, %v421
  %v438 = vpack.c.bf16 %v426, %v422
  %v439 = vpack.c.bf16 %v427, %v423
  %v440 = vpack.c.bf16 %v432, %v428
  %v441 = vpack.c.bf16 %v433, %v429
  %v442 = vpack.c.bf16 %v434, %v430
  %v443 = vpack.c.bf16 %v435, %v431
  %v444 = vld [vmem:[%s5] sm:$0xf]
  %v445 = vld [vmem:[%s5 + $0x4] sm:$0xf]
  %v446 = vld [vmem:[%s5 + $0x8] sm:$0xf]
  %v447 = vld [vmem:[%s5 + $0xc] sm:$0xf]
  %v448 = vld [vmem:[%s5 + $0x10] sm:$0xf]
  %v449 = vld [vmem:[%s5 + $0x14] sm:$0xf]
  %v450 = vld [vmem:[%s5 + $0x18] sm:$0xf]
  %v451 = vld [vmem:[%s5 + $0x1c] sm:$0xf]
  %v452 = vld [vmem:[%s5 + $0x20] sm:$0xf]
  %v453 = vld [vmem:[%s5 + $0x24] sm:$0xf]
  %v454 = vld [vmem:[%s5 + $0x28] sm:$0xf]
  %v455 = vld [vmem:[%s5 + $0x2c] sm:$0xf]
  %v456 = vld [vmem:[%s5 + $0x30] sm:$0xf]
  %v457 = vld [vmem:[%s5 + $0x34] sm:$0xf]
  %v458 = vld [vmem:[%s5 + $0x38] sm:$0xf]
  %v459 = vld [vmem:[%s5 + $0x3c] sm:$0xf]
  %v460 = vld [vmem:[%s5 + $0x40] sm:$0xf]
  %v461 = vld [vmem:[%s5 + $0x44] sm:$0xf]
  %v462 = vld [vmem:[%s5 + $0x48] sm:$0xf]
  %v463 = vld [vmem:[%s5 + $0x4c] sm:$0xf]
  %v464 = vld [vmem:[%s5 + $0x50] sm:$0xf]
  %v465 = vld [vmem:[%s5 + $0x54] sm:$0xf]
  %v466 = vld [vmem:[%s5 + $0x58] sm:$0xf]
  %v467 = vld [vmem:[%s5 + $0x5c] sm:$0xf]
  %v468 = vld [vmem:[%s5 + $0x60] sm:$0xf]
  %v469 = vld [vmem:[%s5 + $0x64] sm:$0xf]
  %v470 = vld [vmem:[%s5 + $0x68] sm:$0xf]
  %v471 = vld [vmem:[%s5 + $0x6c] sm:$0xf]
  %v472 = vld [vmem:[%s5 + $0x70] sm:$0xf]
  %v473 = vld [vmem:[%s5 + $0x74] sm:$0xf]
  %v474 = vld [vmem:[%s5 + $0x78] sm:$0xf]
  %v475 = vld [vmem:[%s5 + $0x7c] sm:$0xf]
  %v476 = vld [vmem:[%s5 + $0x80] sm:$0xf]
  %v477 = vld [vmem:[%s5 + $0x84] sm:$0xf]
  %v478 = vld [vmem:[%s5 + $0x88] sm:$0xf]
  %v479 = vld [vmem:[%s5 + $0x8c] sm:$0xf]
  %v480 = vld [vmem:[%s5 + $0x90] sm:$0xf]
  %v481 = vld [vmem:[%s5 + $0x94] sm:$0xf]
  %v482 = vld [vmem:[%s5 + $0x98] sm:$0xf]
  %v483 = vld [vmem:[%s5 + $0x9c] sm:$0xf]
  %v484 = vld [vmem:[%s5 + $0xa0] sm:$0xf]
  %v485 = vld [vmem:[%s5 + $0xa4] sm:$0xf]
  %v486 = vld [vmem:[%s5 + $0xa8] sm:$0xf]
  %v487 = vld [vmem:[%s5 + $0xac] sm:$0xf]
  %v488 = vld [vmem:[%s5 + $0xb0] sm:$0xf]
  %v489 = vld [vmem:[%s5 + $0xb4] sm:$0xf]
  %v490 = vld [vmem:[%s5 + $0xb8] sm:$0xf]
  %v491 = vld [vmem:[%s5 + $0xbc] sm:$0xf]
  %v492 = vld [vmem:[%s5 + $0xc0] sm:$0xf]
  %v493 = vld [vmem:[%s5 + $0xc4] sm:$0xf]
  %v494 = vld [vmem:[%s5 + $0xc8] sm:$0xf]
  %v495 = vld [vmem:[%s5 + $0xcc] sm:$0xf]
  %v496 = vld [vmem:[%s5 + $0xd0] sm:$0xf]
  %v497 = vld [vmem:[%s5 + $0xd4] sm:$0xf]
  %v498 = vld [vmem:[%s5 + $0xd8] sm:$0xf]
  %v499 = vld [vmem:[%s5 + $0xdc] sm:$0xf]
  %v500 = vld [vmem:[%s5 + $0xe0] sm:$0xf]
  %v501 = vld [vmem:[%s5 + $0xe4] sm:$0xf]
  %v502 = vld [vmem:[%s5 + $0xe8] sm:$0xf]
  %v503 = vld [vmem:[%s5 + $0xec] sm:$0xf]
  %v504 = vld [vmem:[%s5 + $0xf0] sm:$0xf]
  %v505 = vld [vmem:[%s5 + $0xf4] sm:$0xf]
  %v506 = vld [vmem:[%s5 + $0xf8] sm:$0xf]
  %v507 = vld [vmem:[%s5 + $0xfc] sm:$0xf]
  %v508 = vld [vmem:[%s6] sm:$0x1]
  %v510 = vlaneseq
  %v511 = vshrl.u32 %v510, 7
  %v512 = vsub.s32 0, %v511
  %v513 = vrot.slane %v508, %v512
  %v579 = vunpack.c.l.b16 %v444
  %v580 = vunpack.c.l.b16 %v445
  %v581 = vunpack.c.l.b16 %v446
  %v582 = vunpack.c.l.b16 %v447
  %v583 = vunpack.c.l.b16 %v448
  %v584 = vunpack.c.l.b16 %v449
  %v585 = vunpack.c.l.b16 %v450
  %v586 = vunpack.c.l.b16 %v451
  %v587 = vunpack.c.l.b16 %v452
  %v588 = vunpack.c.l.b16 %v453
  %v589 = vunpack.c.l.b16 %v454
  %v590 = vunpack.c.l.b16 %v455
  %v591 = vunpack.c.l.b16 %v456
  %v592 = vunpack.c.l.b16 %v457
  %v593 = vunpack.c.l.b16 %v458
  %v594 = vunpack.c.l.b16 %v459
  %v595 = vunpack.c.l.b16 %v460
  %v596 = vunpack.c.l.b16 %v461
  %v597 = vunpack.c.l.b16 %v462
  %v598 = vunpack.c.l.b16 %v463
  %v599 = vunpack.c.l.b16 %v464
  %v600 = vunpack.c.l.b16 %v465
  %v601 = vunpack.c.l.b16 %v466
  %v602 = vunpack.c.l.b16 %v467
  %v603 = vunpack.c.l.b16 %v468
  %v604 = vunpack.c.l.b16 %v469
  %v605 = vunpack.c.l.b16 %v470
  %v606 = vunpack.c.l.b16 %v471
  %v607 = vunpack.c.l.b16 %v472
  %v608 = vunpack.c.l.b16 %v473
  %v609 = vunpack.c.l.b16 %v474
  %v610 = vunpack.c.l.b16 %v475
  %v611 = vunpack.c.l.b16 %v476
  %v612 = vunpack.c.l.b16 %v477
  %v613 = vunpack.c.l.b16 %v478
  %v614 = vunpack.c.l.b16 %v479
  %v615 = vunpack.c.l.b16 %v480
  %v616 = vunpack.c.l.b16 %v481
  %v617 = vunpack.c.l.b16 %v482
  %v618 = vunpack.c.l.b16 %v483
  %v619 = vunpack.c.l.b16 %v484
  %v620 = vunpack.c.l.b16 %v485
  %v621 = vunpack.c.l.b16 %v486
  %v622 = vunpack.c.l.b16 %v487
  %v623 = vunpack.c.l.b16 %v488
  %v624 = vunpack.c.l.b16 %v489
  %v625 = vunpack.c.l.b16 %v490
  %v626 = vunpack.c.l.b16 %v491
  %v627 = vunpack.c.l.b16 %v492
  %v628 = vunpack.c.l.b16 %v493
  %v629 = vunpack.c.l.b16 %v494
  %v630 = vunpack.c.l.b16 %v495
  %v631 = vunpack.c.l.b16 %v496
  %v632 = vunpack.c.l.b16 %v497
  %v633 = vunpack.c.l.b16 %v498
  %v634 = vunpack.c.l.b16 %v499
  %v635 = vunpack.c.l.b16 %v500
  %v636 = vunpack.c.l.b16 %v501
  %v637 = vunpack.c.l.b16 %v502
  %v638 = vunpack.c.l.b16 %v503
  %v639 = vunpack.c.l.b16 %v504
  %v640 = vunpack.c.l.b16 %v505
  %v641 = vunpack.c.l.b16 %v506
  %v642 = vunpack.c.l.b16 %v507
  %v643 = vpack.c.b16 %v580, %v579
  %v644 = vpack.c.b16 %v582, %v581
  %v645 = vpack.c.b16 %v584, %v583
  %v646 = vpack.c.b16 %v586, %v585
  %v647 = vpack.c.b16 %v588, %v587
  %v648 = vpack.c.b16 %v590, %v589
  %v649 = vpack.c.b16 %v592, %v591
  %v650 = vpack.c.b16 %v594, %v593
  %v651 = vpack.c.b16 %v596, %v595
  %v652 = vpack.c.b16 %v598, %v597
  %v653 = vpack.c.b16 %v600, %v599
  %v654 = vpack.c.b16 %v602, %v601
  %v655 = vpack.c.b16 %v604, %v603
  %v656 = vpack.c.b16 %v606, %v605
  %v657 = vpack.c.b16 %v608, %v607
  %v658 = vpack.c.b16 %v610, %v609
  %v659 = vpack.c.b16 %v612, %v611
  %v660 = vpack.c.b16 %v614, %v613
  %v661 = vpack.c.b16 %v616, %v615
  %v662 = vpack.c.b16 %v618, %v617
  %v663 = vpack.c.b16 %v620, %v619
  %v664 = vpack.c.b16 %v622, %v621
  %v665 = vpack.c.b16 %v624, %v623
  %v666 = vpack.c.b16 %v626, %v625
  %v667 = vpack.c.b16 %v628, %v627
  %v668 = vpack.c.b16 %v630, %v629
  %v669 = vpack.c.b16 %v632, %v631
  %v670 = vpack.c.b16 %v634, %v633
  %v671 = vpack.c.b16 %v636, %v635
  %v672 = vpack.c.b16 %v638, %v637
  %v673 = vpack.c.b16 %v640, %v639
  %v674 = vpack.c.b16 %v642, %v641
  %707 = vmatprep.subr.bf16.mxu0 0
  %708 = vmatpush1.bf16.msra.mxu0 %v643
  %709 = vmatprep.subr.bf16.mxu0 0
  %710 = vmatpush1.bf16.msra.mxu0 %v644
  %711 = vmatprep.subr.bf16.mxu0 0
  %712 = vmatpush1.bf16.msra.mxu0 %v645
  %713 = vmatprep.subr.bf16.mxu0 0
  %714 = vmatpush1.bf16.msra.mxu0 %v646
  %715 = vmatprep.subr.bf16.mxu0 0
  %716 = vmatpush1.bf16.msra.mxu0 %v647
  %717 = vmatprep.subr.bf16.mxu0 0
  %718 = vmatpush1.bf16.msra.mxu0 %v648
  %719 = vmatprep.subr.bf16.mxu0 0
  %720 = vmatpush1.bf16.msra.mxu0 %v649
  %721 = vmatprep.subr.bf16.mxu0 0
  %722 = vmatpush1.bf16.msra.mxu0 %v650
  %723 = vmatprep.subr.bf16.mxu0 0
  %724 = vmatpush1.bf16.msra.mxu0 %v651
  %725 = vmatprep.subr.bf16.mxu0 0
  %726 = vmatpush1.bf16.msra.mxu0 %v652
  %727 = vmatprep.subr.bf16.mxu0 0
  %728 = vmatpush1.bf16.msra.mxu0 %v653
  %729 = vmatprep.subr.bf16.mxu0 0
  %730 = vmatpush1.bf16.msra.mxu0 %v654
  %731 = vmatprep.subr.bf16.mxu0 0
  %732 = vmatpush1.bf16.msra.mxu0 %v655
  %733 = vmatprep.subr.bf16.mxu0 0
  %734 = vmatpush1.bf16.msra.mxu0 %v656
  %735 = vmatprep.subr.bf16.mxu0 0
  %736 = vmatpush1.bf16.msra.mxu0 %v657
  %737 = vmatprep.subr.bf16.mxu0 0
  %738 = vmatpush1.bf16.msra.mxu0 %v658
  %739 = vmatprep.mubr.bf16.mxu0 %v437
  %740 = vmatmul.mubr.bf16.gmra.mrb[0].mxu0 %v436
  %v741 = vpop.f32.mrb[0].mxu0
  %v742 = vadd.f32 %v513, %v741
  %v743 = vpop.f32.mrb[0].mxu0
  %v744 = vpop.f32.mrb[0].mxu0
  %v745 = vadd.f32 %v513, %v744
  %v746 = vpop.f32.mrb[0].mxu0
  %747 = vmatprep.mubr.bf16.mxu0 %v441
  %748 = vmatmul.mubr.bf16.gmra.mrb[0].mxu0 %v440
  %v749 = vpop.f32.mrb[0].mxu0
  %v750 = vadd.f32 %v513, %v749
  %v751 = vpop.f32.mrb[0].mxu0
  %v752 = vpop.f32.mrb[0].mxu0
  %v753 = vadd.f32 %v513, %v752
  %v754 = vpop.f32.mrb[0].mxu0
  %755 = vdwg.mxu0
  %756 = vmatprep.subr.bf16.mxu0 0
  %757 = vmatpush1.bf16.msra.mxu0 %v659
  %758 = vmatprep.subr.bf16.mxu0 0
  %759 = vmatpush1.bf16.msra.mxu0 %v660
  %760 = vmatprep.subr.bf16.mxu0 0
  %761 = vmatpush1.bf16.msra.mxu0 %v661
  %762 = vmatprep.subr.bf16.mxu0 0
  %763 = vmatpush1.bf16.msra.mxu0 %v662
  %764 = vmatprep.subr.bf16.mxu0 0
  %765 = vmatpush1.bf16.msra.mxu0 %v663
  %766 = vmatprep.subr.bf16.mxu0 0
  %767 = vmatpush1.bf16.msra.mxu0 %v664
  %768 = vmatprep.subr.bf16.mxu0 0
  %769 = vmatpush1.bf16.msra.mxu0 %v665
  %770 = vmatprep.subr.bf16.mxu0 0
  %771 = vmatpush1.bf16.msra.mxu0 %v666
  %772 = vmatprep.subr.bf16.mxu0 0
  %773 = vmatpush1.bf16.msra.mxu0 %v667
  %774 = vmatprep.subr.bf16.mxu0 0
  %775 = vmatpush1.bf16.msra.mxu0 %v668
  %776 = vmatprep.subr.bf16.mxu0 0
  %777 = vmatpush1.bf16.msra.mxu0 %v669
  %778 = vmatprep.subr.bf16.mxu0 0
  %779 = vmatpush1.bf16.msra.mxu0 %v670
  %780 = vmatprep.subr.bf16.mxu0 0
  %781 = vmatpush1.bf16.msra.mxu0 %v671
  %782 = vmatprep.subr.bf16.mxu0 0
  %783 = vmatpush1.bf16.msra.mxu0 %v672
  %784 = vmatprep.subr.bf16.mxu0 0
  %785 = vmatpush1.bf16.msra.mxu0 %v673
  %786 = vmatprep.subr.bf16.mxu0 0
  %787 = vmatpush1.bf16.msra.mxu0 %v674
  %788 = vmatprep.mubr.bf16.mxu0 %v439
  %789 = vmatmul.mubr.bf16.gmra.mrb[0].mxu0 %v438
  %v790 = vpop.f32.mrb[0].mxu0
  %v791 = vadd.f32 %v742, %v790
  %v792 = vpop.f32.mrb[0].mxu0
  %v793 = vpop.f32.mrb[0].mxu0
  %v794 = vadd.f32 %v745, %v793
  %v795 = vpop.f32.mrb[0].mxu0
  %796 = vmatprep.mubr.bf16.mxu0 %v443
  %797 = vmatmul.mubr.bf16.gmra.mrb[0].mxu0 %v442
  %v798 = vpop.f32.mrb[0].mxu0
  %v799 = vadd.f32 %v750, %v798
  %v800 = vpop.f32.mrb[0].mxu0
  %v801 = vpop.f32.mrb[0].mxu0
  %v802 = vadd.f32 %v753, %v801
  %v803 = vpop.f32.mrb[0].mxu0
  %804 = vdwg.mxu0
  %v805 = vadd.f32 %v27, %v791
  %v806 = vadd.f32 %v28, %v794
  %v807 = vadd.f32 %v29, %v799
  %v808 = vadd.f32 %v30, %v802
  %809 = vst [vmem:[%s7] sm:$0xff] %v805
  %810 = vst [vmem:[%s7 + $0x8] sm:$0xff] %v806
  %811 = vst [vmem:[%s7 + $0x10] sm:$0xff] %v807
  %812 = vst [vmem:[%s7 + $0x18] sm:$0xff] %v808
  // Predicated region
  $region30: #{gpt_forward.6} parent=0 // pred_check
    _
  $region31: #{gpt_forward.6} parent=0 // pred_check_branch
    %814 = sbr.rel (0) target = $region33
  $region32: #{gpt_forward.6} parent=0 // pred_region
    _
  $region33: #{gpt_forward.6} parent=0 // pred_fallthru
    _
  // Predicated region
  $region34: #{gpt_forward.6} parent=0 // pred_check
    _
  $region35: #{gpt_forward.6} parent=0 // pred_check_branch
    %816 = sbr.rel (0) target = $region37
  $region36: #{gpt_forward.6} parent=0 // pred_region
    _
  $region37: #{gpt_forward.6} parent=0 // pred_fallthru
    _

// kernel: gpt_forward.5
$region0: #{gpt_forward.5}
  #allocation0 [shape = 'u32[]', space=smem, size = 0x4, offset = 0x4, fixed_abs, tag = 'smem constant byte address 0x4 - core index']
  #allocation1 [shape = 'u32[144,128]{1,0:T(1,128)}', space=vmem, size = 0x12000, scoped, tag = 'internal scratch']
  %s0 = inlined_call_operand.vmem [shape: f32[2,16,128], index: 0, kind: input, shape index: {}]
  %s1 = inlined_call_operand.vmem [shape: f32[1,128], index: 1, kind: input, shape index: {}]
  %s2 = inlined_call_operand.vmem [shape: f32[1,128], index: 2, kind: input, shape index: {}, may-alias: {2,5}]
  %s3 = inlined_call_operand.vmem [shape: bf16[128,384], index: 3, kind: input, shape index: {}]
  %s4 = inlined_call_operand.vmem [shape: bf16[128,128], index: 4, kind: input, shape index: {}]
  %s5 = inlined_call_operand.vmem [shape: f32[1,128], index: 5, kind: input, shape index: {}, may-alias: {2,5}]
  %s6 = inlined_call_operand.vmem [shape: f32[2,16,128], index: 6, kind: output, shape index: {}]
  %s7 = sld [smem:[#allocation0]]
  $region57: #{gpt_forward.5} parent=0
    _
  %s9 = ssub.s32 1, %s7
  %s10 = scalar_select 0, %s9, %s7
  loop: start=0, step=1, limit=4
  $region2: #{gpt_forward.5} parent=0 // loop_pre_header
    _
  $region3: #{gpt_forward.5} parent=0 // loop_header
    %s12 = sphi 0, %s16
    %p13 = scmp.ge.s32.totalorder %s12, 4
    %s22 = sphi 0, %s24
    %s25 = sphi 0, %s22
    %s26 = sphi 0, %s25
    %s42 = sphi 0, %s26
    %s46 = sphi 0, %s46
    %s48 = sphi 0, %s46
    %s49 = sphi 0, %s48
    %s63 = sphi 0, %s49
    %s67 = sphi 0, %s67
    %s69 = sphi 0, %s67
    %s70 = sphi 0, %s69
    %s84 = sphi 0, %s70
    %s88 = sphi 0, %s88
    %s90 = sphi 0, %s88
    %s91 = sphi 0, %s90
    %s105 = sphi 0, %s91
    %s109 = sphi 0, %s109
    %s111 = sphi 0, %s109
    %s112 = sphi 0, %s111
    %s126 = sphi 0, %s112
    %s130 = sphi 0, %s130
    %s132 = sphi 0, %s130
    %s133 = sphi 0, %s132
    %s147 = sphi 0, %s133
    %s153 = sphi 0, %s155
    %s156 = sphi 0, %s153
    %s157 = sphi 0, %s156
    %s173 = sphi 0, %s157
  $region4: #{gpt_forward.5} parent=0 // loop_header_branch
    %15 = sbr.rel (%p13) target = $region8
  $region5: #{gpt_forward.5} parent=0 // loop_body
    %s17 = ssub.s32 %s12, 1
    %s18 = ssub.s32 %s12, 2
    %s19 = sadd.s32 %s12, 1
    %s20 = ssub.s32 %s12, %s19
    %p21 = scmp.eq.s32.totalorder %s20, 0
    %s23 = sadd.s32 %s22, 1
    %s24 = scalar_select %p21, %s22, %s23
    %p27 = pneg %p21
    %p28 = scmp.eq.s32.totalorder %s12, 1
    %p29 = por %p27, %p28
    %p30 = scmp.ne.s32.totalorder %s22, %s25
    %p31 = scmp.eq.s32.totalorder %s12, 0
    %p32 = por %p30, %p31
    %p33 = scmp.ne.s32.totalorder %s22, %s25
    %p34 = scmp.eq.s32.totalorder %s17, 1
    %p35 = por %p33, %p34
    %p36 = scmp.ne.s32.totalorder %s25, %s26
    %p37 = scmp.eq.s32.totalorder %s17, 0
    %p38 = por %p36, %p37
    %p39 = scmp.ne.s32.totalorder %s25, %s26
    %p40 = scmp.eq.s32.totalorder %s18, 1
    %p41 = por %p39, %p40
    %p43 = scmp.ne.s32.totalorder %s26, %s42
    %p44 = scmp.eq.s32.totalorder %s18, 0
    %p45 = por %p43, %p44
    %s47 = sadd.s32 %s46, 1
    %p50 = scmp.eq.s32.totalorder %s12, 1
    %p51 = scmp.ne.s32.totalorder %s46, %s48
    %p52 = scmp.eq.s32.totalorder %s12, 0
    %p53 = por %p51, %p52
    %p54 = scmp.ne.s32.totalorder %s46, %s48
    %p55 = scmp.eq.s32.totalorder %s17, 1
    %p56 = por %p54, %p55
    %p57 = scmp.ne.s32.totalorder %s48, %s49
    %p58 = scmp.eq.s32.totalorder %s17, 0
    %p59 = por %p57, %p58
    %p60 = scmp.ne.s32.totalorder %s48, %s49
    %p61 = scmp.eq.s32.totalorder %s18, 1
    %p62 = por %p60, %p61
    %p64 = scmp.ne.s32.totalorder %s49, %s63
    %p65 = scmp.eq.s32.totalorder %s18, 0
    %p66 = por %p64, %p65
    %s68 = sadd.s32 %s67, 1
    %p71 = scmp.eq.s32.totalorder %s12, 1
    %p72 = scmp.ne.s32.totalorder %s67, %s69
    %p73 = scmp.eq.s32.totalorder %s12, 0
    %p74 = por %p72, %p73
    %p75 = scmp.ne.s32.totalorder %s67, %s69
    %p76 = scmp.eq.s32.totalorder %s17, 1
    %p77 = por %p75, %p76
    %p78 = scmp.ne.s32.totalorder %s69, %s70
    %p79 = scmp.eq.s32.totalorder %s17, 0
    %p80 = por %p78, %p79
    %p81 = scmp.ne.s32.totalorder %s69, %s70
    %p82 = scmp.eq.s32.totalorder %s18, 1
    %p83 = por %p81, %p82
    %p85 = scmp.ne.s32.totalorder %s70, %s84
    %p86 = scmp.eq.s32.totalorder %s18, 0
    %p87 = por %p85, %p86
    %s89 = sadd.s32 %s88, 1
    %p92 = scmp.eq.s32.totalorder %s12, 1
    %p93 = scmp.ne.s32.totalorder %s88, %s90
    %p94 = scmp.eq.s32.totalorder %s12, 0
    %p95 = por %p93, %p94
    %p96 = scmp.ne.s32.totalorder %s88, %s90
    %p97 = scmp.eq.s32.totalorder %s17, 1
    %p98 = por %p96, %p97
    %p99 = scmp.ne.s32.totalorder %s90, %s91
    %p100 = scmp.eq.s32.totalorder %s17, 0
    %p101 = por %p99, %p100
    %p102 = scmp.ne.s32.totalorder %s90, %s91
    %p103 = scmp.eq.s32.totalorder %s18, 1
    %p104 = por %p102, %p103
    %p106 = scmp.ne.s32.totalorder %s91, %s105
    %p107 = scmp.eq.s32.totalorder %s18, 0
    %p108 = por %p106, %p107
    %s110 = sadd.s32 %s109, 1
    %p113 = scmp.eq.s32.totalorder %s12, 1
    %p114 = scmp.ne.s32.totalorder %s109, %s111
    %p115 = scmp.eq.s32.totalorder %s12, 0
    %p116 = por %p114, %p115
    %p117 = scmp.ne.s32.totalorder %s109, %s111
    %p118 = scmp.eq.s32.totalorder %s17, 1
    %p119 = por %p117, %p118
    %p120 = scmp.ne.s32.totalorder %s111, %s112
    %p121 = scmp.eq.s32.totalorder %s17, 0
    %p122 = por %p120, %p121
    %p123 = scmp.ne.s32.totalorder %s111, %s112
    %p124 = scmp.eq.s32.totalorder %s18, 1
    %p125 = por %p123, %p124
    %p127 = scmp.ne.s32.totalorder %s112, %s126
    %p128 = scmp.eq.s32.totalorder %s18, 0
    %p129 = por %p127, %p128
    %s131 = sadd.s32 %s130, 1
    %p134 = scmp.eq.s32.totalorder %s12, 1
    %p135 = scmp.ne.s32.totalorder %s130, %s132
    %p136 = scmp.eq.s32.totalorder %s12, 0
    %p137 = por %p135, %p136
    %p138 = scmp.ne.s32.totalorder %s130, %s132
    %p139 = scmp.eq.s32.totalorder %s17, 1
    %p140 = por %p138, %p139
    %p141 = scmp.ne.s32.totalorder %s132, %s133
    %p142 = scmp.eq.s32.totalorder %s17, 0
    %p143 = por %p141, %p142
    %p144 = scmp.ne.s32.totalorder %s132, %s133
    %p145 = scmp.eq.s32.totalorder %s18, 1
    %p146 = por %p144, %p145
    %p148 = scmp.ne.s32.totalorder %s133, %s147
    %p149 = scmp.eq.s32.totalorder %s18, 0
    %p150 = por %p148, %p149
    %s151 = ssub.s32 %s12, %s19
    %p152 = scmp.eq.s32.totalorder %s151, 0
    %s154 = sadd.s32 %s153, 1
    %s155 = scalar_select %p152, %s153, %s154
    %p158 = pneg %p152
    %p159 = scmp.eq.s32.totalorder %s12, 1
    %p160 = por %p158, %p159
    %p161 = scmp.ne.s32.totalorder %s153, %s156
    %p162 = scmp.eq.s32.totalorder %s12, 0
    %p163 = por %p161, %p162
    %p164 = scmp.ne.s32.totalorder %s153, %s156
    %p165 = scmp.eq.s32.totalorder %s17, 1
    %p166 = por %p164, %p165
    %p167 = scmp.ne.s32.totalorder %s156, %s157
    %p168 = scmp.eq.s32.totalorder %s17, 0
    %p169 = por %p167, %p168
    %p170 = scmp.ne.s32.totalorder %s156, %s157
    %p171 = scmp.eq.s32.totalorder %s18, 1
    %p172 = por %p170, %p171
    %p174 = scmp.ne.s32.totalorder %s157, %s173
    %p175 = scmp.eq.s32.totalorder %s18, 0
    %p176 = por %p174, %p175
    %p177 = scmp.le.s32.totalorder 1, %s12
    %p178 = scmp.lt.s32.totalorder %s12, 3
    %p179 = pnand %p177, %p178
    %p180 = pneg %p179
    // Predicated region
    $region9: #{gpt_forward.5} parent=5 // pred_check
      _
    $region10: #{gpt_forward.5} parent=5 // pred_check_branch
      %182 = sbr.rel (%p179) target = $region12
    $region11: #{gpt_forward.5} parent=5 // pred_region
      %s183 = ssub.s32 %s12, 1
      // Predicated region
      $region13: #{gpt_forward.5} parent=11 // pred_check
        %p184 = pneg %p59
      $region14: #{gpt_forward.5} parent=11 // pred_check_branch
        %186 = sbr.rel (%p184) target = $region16
      $region15: #{gpt_forward.5} parent=11 // pred_region
        _
      $region16: #{gpt_forward.5} parent=11 // pred_fallthru
        _
      // Predicated region
      $region17: #{gpt_forward.5} parent=11 // pred_check
        %p187 = pneg %p80
      $region18: #{gpt_forward.5} parent=11 // pred_check_branch
        %189 = sbr.rel (%p187) target = $region20
      $region19: #{gpt_forward.5} parent=11 // pred_region
        _
      $region20: #{gpt_forward.5} parent=11 // pred_fallthru
        _
      // Predicated region
      $region21: #{gpt_forward.5} parent=11 // pred_check
        %p190 = pneg %p101
      $region22: #{gpt_forward.5} parent=11 // pred_check_branch
        %192 = sbr.rel (%p190) target = $region24
      $region23: #{gpt_forward.5} parent=11 // pred_region
        _
      $region24: #{gpt_forward.5} parent=11 // pred_fallthru
        _
      // Predicated region
      $region25: #{gpt_forward.5} parent=11 // pred_check
        %p193 = pneg %p122
      $region26: #{gpt_forward.5} parent=11 // pred_check_branch
        %195 = sbr.rel (%p193) target = $region28
      $region27: #{gpt_forward.5} parent=11 // pred_region
        _
      $region28: #{gpt_forward.5} parent=11 // pred_fallthru
        _
      // Predicated region
      $region29: #{gpt_forward.5} parent=11 // pred_check
        %p196 = pneg %p143
      $region30: #{gpt_forward.5} parent=11 // pred_check_branch
        %198 = sbr.rel (%p196) target = $region32
      $region31: #{gpt_forward.5} parent=11 // pred_region
        _
      $region32: #{gpt_forward.5} parent=11 // pred_fallthru
        _
    $region12: #{gpt_forward.5} parent=5 // pred_fallthru
      _
    %p199 = scmp.lt.s32.totalorder %s12, 2
    // Predicated region
    $region33: #{gpt_forward.5} parent=5 // pred_check
      %p200 = pneg %p199
    $region34: #{gpt_forward.5} parent=5 // pred_check_branch
      %202 = sbr.rel (%p200) target = $region36
    $region35: #{gpt_forward.5} parent=5 // pred_region
      // Predicated region
      $region37: #{gpt_forward.5} parent=35 // pred_check
        %p203 = pneg %p32
      $region38: #{gpt_forward.5} parent=35 // pred_check_branch
        %205 = sbr.rel (%p203) target = $region40
      $region39: #{gpt_forward.5} parent=35 // pred_region
        %p206 = scmp.lt.s32.totalorder %s12, 1
        %s207 = scalar_select %p206, %s12, 1
        %s208 = smul.addr %s207, 2
        %s209 = smul.addr %s208, 8
        %s210 = scalar_lea.vmem %s0, %s209
      $region40: #{gpt_forward.5} parent=35 // pred_fallthru
        _
    $region36: #{gpt_forward.5} parent=5 // pred_fallthru
      _
    %p211 = scmp.le.s32.totalorder 1, %s12
    %p212 = scmp.lt.s32.totalorder %s12, 3
    %p213 = pnand %p211, %p212
    %p214 = pneg %p213
    // Predicated region
    $region41: #{gpt_forward.5} parent=5 // pred_check
      _
    $region42: #{gpt_forward.5} parent=5 // pred_check_branch
      %216 = sbr.rel (%p213) target = $region44
    $region43: #{gpt_forward.5} parent=5 // pred_region
      %s217 = ssub.s32 %s12, 1
      %p218 = scmp.lt.s32.totalorder %s17, 1
      %s219 = scalar_select %p218, %s17, 1
      %s220 = smul.addr %s219, 2
      %s221 = smul.addr %s220, 8
      %s222 = scalar_lea.vmem %s0, %s221
      %p223 = pneg %p38
      %p224 = pneg %p35
      %p225 = pneg %p59
      %p226 = pneg %p56
      %p227 = pneg %p80
      %p228 = pneg %p77
      %p229 = pneg %p101
      %p230 = pneg %p98
      %p231 = pneg %p122
      %p232 = pneg %p119
      %p233 = pneg %p143
      %p234 = pneg %p140
      %p235 = pneg %p169
      %p236 = pneg %p166
      %p237 = scmp.lt.s32.totalorder %s17, 1
      %s238 = scalar_select %p237, %s17, 1
      %s239 = smul.addr %s238, 2
      %s240 = smul.addr %s239, 8
      %s241 = scalar_lea.vmem %s6, %s240
      %p242 = scmp.lt.s32.totalorder %s17, 1
      %s243 = scalar_select %p242, %s17, 1
      %s244 = smul.addr %s243, 2
      %s245 = smul.addr %s244, 8
      %s246 = scalar_lea.vmem %s0, %s245
      %p247 = scmp.lt.s32.totalorder %s17, 1
      %s248 = scalar_select %p247, %s17, 1
      %s249 = smul.addr %s248, 2
      %s250 = smul.addr %s249, 8
      %s251 = scalar_lea.vmem %s6, %s250
      %v253 = vld [vmem:[%s246] sm:$0xff]
      %v254 = vld [vmem:[%s246 + $0x8] sm:$0xff]
      %v255 = vld [vmem:[%s1] sm:$0x1]
      %v256 = vld [vmem:[%s2] sm:$0x1]
      %257 = vadd.xlane.f32.xlu0 %v253
      %v258 = vpop.xlane.xlu0 %257
      %259 = vadd.xlane.f32.xlu0 %v254
      %v260 = vpop.xlane.xlu0 %259
      %v261 = vrcp.pop 128.0
      %v262 = vmul.f32 %v258, %v261
      %v263 = vmul.f32 %v260, %v261
      %v264 = vsub.f32 %v253, %v262
      %v265 = vsub.f32 %v254, %v263
      %v266 = vmul.f32 %v264, %v264
      %v267 = vmul.f32 %v265, %v265
      %268 = vadd.xlane.f32.xlu0 %v266
      %v269 = vpop.xlane.xlu0 %268
      %270 = vadd.xlane.f32.xlu0 %v267
      %v271 = vpop.xlane.xlu0 %270
      %v272 = vmul.f32 %v269, %v261
      %v273 = vmul.f32 %v271, %v261
      %v274 = vadd.f32 %v272, 1e-05
      %v275 = vadd.f32 %v273, 1e-05
      %v276 = vrsqrt.pop %v274
      %v277 = vrsqrt.pop %v275
      %v278 = vmul.f32 %v264, %v276
      %v279 = vmul.f32 %v265, %v277
      %v281 = vlaneseq
      %v282 = vshrl.u32 %v281, 7
      %v283 = vsub.s32 0, %v282
      %v284 = vrot.slane %v255, %v283
      %v286 = vmul.f32 %v278, %v284
      %v287 = vmul.f32 %v279, %v284
      %v289 = vlaneseq
      %v290 = vshrl.u32 %v289, 7
      %v291 = vsub.s32 0, %v290
      %v292 = vrot.slane %v256, %v291
      %v294 = vadd.f32 %v286, %v292
      %v295 = vadd.f32 %v287, %v292
      %v296 = vpack.c.bf16 %v295, %v294
      %v297 = vld [vmem:[%s3] sm:$0xff]
      %v298 = vld [vmem:[%s3 + $0x8] sm:$0xf]
      %v299 = vld [vmem:[%s3 + $0xc] sm:$0xff]
      %v300 = vld [vmem:[%s3 + $0x14] sm:$0xf]
      %v301 = vld [vmem:[%s3 + $0x18] sm:$0xff]
      %v302 = vld [vmem:[%s3 + $0x20] sm:$0xf]
      %v303 = vld [vmem:[%s3 + $0x24] sm:$0xff]
      %v304 = vld [vmem:[%s3 + $0x2c] sm:$0xf]
      %v305 = vld [vmem:[%s3 + $0x30] sm:$0xff]
      %v306 = vld [vmem:[%s3 + $0x38] sm:$0xf]
      %v307 = vld [vmem:[%s3 + $0x3c] sm:$0xff]
      %v308 = vld [vmem:[%s3 + $0x44] sm:$0xf]
      %v309 = vld [vmem:[%s3 + $0x48] sm:$0xff]
      %v310 = vld [vmem:[%s3 + $0x50] sm:$0xf]
      %v311 = vld [vmem:[%s3 + $0x54] sm:$0xff]
      %v312 = vld [vmem:[%s3 + $0x5c] sm:$0xf]
      %v313 = vld [vmem:[%s3 + $0x60] sm:$0xff]
      %v314 = vld [vmem:[%s3 + $0x68] sm:$0xf]
      %v315 = vld [vmem:[%s3 + $0x6c] sm:$0xff]
      %v316 = vld [vmem:[%s3 + $0x74] sm:$0xf]
      %v317 = vld [vmem:[%s3 + $0x78] sm:$0xff]
      %v318 = vld [vmem:[%s3 + $0x80] sm:$0xf]
      %v319 = vld [vmem:[%s3 + $0x84] sm:$0xff]
      %v320 = vld [vmem:[%s3 + $0x8c] sm:$0xf]
      %v321 = vld [vmem:[%s3 + $0x90] sm:$0xff]
      %v322 = vld [vmem:[%s3 + $0x98] sm:$0xf]
      %v323 = vld [vmem:[%s3 + $0x9c] sm:$0xff]
      %v324 = vld [vmem:[%s3 + $0xa4] sm:$0xf]
      %v325 = vld [vmem:[%s3 + $0xa8] sm:$0xff]
      %v326 = vld [vmem:[%s3 + $0xb0] sm:$0xf]
      %v327 = vld [vmem:[%s3 + $0xb4] sm:$0xff]
      %v328 = vld [vmem:[%s3 + $0xbc] sm:$0xf]
      %v361 = vunpack.c.l.b16 %v297
      %v362 = vunpack.c.h.b16 %v297
      %v363 = vunpack.c.l.b16 %v298
      %v364 = vunpack.c.l.b16 %v299
      %v365 = vunpack.c.h.b16 %v299
      %v366 = vunpack.c.l.b16 %v300
      %v367 = vunpack.c.l.b16 %v301
      %v368 = vunpack.c.h.b16 %v301
      %v369 = vunpack.c.l.b16 %v302
      %v370 = vunpack.c.l.b16 %v303
      %v371 = vunpack.c.h.b16 %v303
      %v372 = vunpack.c.l.b16 %v304
      %v373 = vunpack.c.l.b16 %v305
      %v374 = vunpack.c.h.b16 %v305
      %v375 = vunpack.c.l.b16 %v306
      %v376 = vunpack.c.l.b16 %v307
      %v377 = vunpack.c.h.b16 %v307
      %v378 = vunpack.c.l.b16 %v308
      %v379 = vunpack.c.l.b16 %v309
      %v380 = vunpack.c.h.b16 %v309
      %v381 = vunpack.c.l.b16 %v310
      %v382 = vunpack.c.l.b16 %v311
      %v383 = vunpack.c.h.b16 %v311
      %v384 = vunpack.c.l.b16 %v312
      %v385 = vunpack.c.l.b16 %v313
      %v386 = vunpack.c.h.b16 %v313
      %v387 = vunpack.c.l.b16 %v314
      %v388 = vunpack.c.l.b16 %v315
      %v389 = vunpack.c.h.b16 %v315
      %v390 = vunpack.c.l.b16 %v316
      %v391 = vunpack.c.l.b16 %v317
      %v392 = vunpack.c.h.b16 %v317
      %v393 = vunpack.c.l.b16 %v318
      %v394 = vunpack.c.l.b16 %v319
      %v395 = vunpack.c.h.b16 %v319
      %v396 = vunpack.c.l.b16 %v320
      %v397 = vunpack.c.l.b16 %v321
      %v398 = vunpack.c.h.b16 %v321
      %v399 = vunpack.c.l.b16 %v322
      %v400 = vunpack.c.l.b16 %v323
      %v401 = vunpack.c.h.b16 %v323
      %v402 = vunpack.c.l.b16 %v324
      %v403 = vunpack.c.l.b16 %v325
      %v404 = vunpack.c.h.b16 %v325
      %v405 = vunpack.c.l.b16 %v326
      %v406 = vunpack.c.l.b16 %v327
      %v407 = vunpack.c.h.b16 %v327
      %v408 = vunpack.c.l.b16 %v328
      %v409 = vpack.c.b16 %v364, %v361
      %v410 = vpack.c.b16 %v365, %v362
      %v411 = vpack.c.b16 %v366, %v363
      %v412 = vpack.c.b16 %v370, %v367
      %v413 = vpack.c.b16 %v371, %v368
      %v414 = vpack.c.b16 %v372, %v369
      %v415 = vpack.c.b16 %v376, %v373
      %v416 = vpack.c.b16 %v377, %v374
      %v417 = vpack.c.b16 %v378, %v375
      %v418 = vpack.c.b16 %v382, %v379
      %v419 = vpack.c.b16 %v383, %v380
      %v420 = vpack.c.b16 %v384, %v381
      %v421 = vpack.c.b16 %v388, %v385
      %v422 = vpack.c.b16 %v389, %v386
      %v423 = vpack.c.b16 %v390, %v387
      %v424 = vpack.c.b16 %v394, %v391
      %v425 = vpack.c.b16 %v395, %v392
      %v426 = vpack.c.b16 %v396, %v393
      %v427 = vpack.c.b16 %v400, %v397
      %v428 = vpack.c.b16 %v401, %v398
      %v429 = vpack.c.b16 %v402, %v399
      %v430 = vpack.c.b16 %v406, %v403
      %v431 = vpack.c.b16 %v407, %v404
      %v432 = vpack.c.b16 %v408, %v405
      %457 = vmatprep.subr.bf16.mxu0 %v410
      %458 = vmatpush1.bf16.msra.mxu0 %v409
      %459 = vmatprep.subr.bf16.mxu0 %v413
      %460 = vmatpush1.bf16.msra.mxu0 %v412
      %461 = vmatprep.subr.bf16.mxu0 %v416
      %462 = vmatpush1.bf16.msra.mxu0 %v415
      %463 = vmatprep.subr.bf16.mxu0 %v419
      %464 = vmatpush1.bf16.msra.mxu0 %v418
      %465 = vmatprep.subr.bf16.mxu0 %v422
      %466 = vmatpush1.bf16.msra.mxu0 %v421
      %467 = vmatprep.subr.bf16.mxu0 %v425
      %468 = vmatpush1.bf16.msra.mxu0 %v424
      %469 = vmatprep.subr.bf16.mxu0 %v428
      %470 = vmatpush1.bf16.msra.mxu0 %v427
      %471 = vmatprep.subr.bf16.mxu0 %v431
      %472 = vmatpush1.bf16.msra.mxu0 %v430
      %473 = vmatprep.subr.bf16.mxu0 0
      %474 = vmatpush1.bf16.msra.mxu0 0
      %475 = vmatprep.subr.bf16.mxu0 0
      %476 = vmatpush1.bf16.msra.mxu0 0
      %477 = vmatprep.subr.bf16.mxu0 0
      %478 = vmatpush1.bf16.msra.mxu0 0
      %479 = vmatprep.subr.bf16.mxu0 0
      %480 = vmatpush1.bf16.msra.mxu0 0
      %481 = vmatprep.subr.bf16.mxu0 0
      %482 = vmatpush1.bf16.msra.mxu0 0
      %483 = vmatprep.subr.bf16.mxu0 0
      %484 = vmatpush1.bf16.msra.mxu0 0
      %485 = vmatprep.subr.bf16.mxu0 0
      %486 = vmatpush1.bf16.msra.mxu0 0
      %487 = vmatprep.subr.bf16.mxu0 0
      %488 = vmatpush1.bf16.msra.mxu0 0
      %489 = vmatprep.mubr.bf16.mxu0 0
      %490 = vmatmul.mubr.bf16.gmra.mrb[0].mxu0 %v296
      %v491 = vpop.f32.mrb[0].mxu0
      %v492 = vadd.f32 0.0, %v491
      %v493 = vpop.f32.mrb[0].mxu0
      %v494 = vadd.f32 0.0, %v493
      %v495 = vpop.f32.mrb[0].mxu0
      %v496 = vadd.f32 0.0, %v495
      %v497 = vpop.f32.mrb[0].mxu0
      %v498 = vadd.f32 0.0, %v497
      %499 = vdwg.mxu0
      %500 = vmatprep.subr.bf16.mxu0 0
      %501 = vmatpush1.bf16.msra.mxu0 %v411
      %502 = vmatprep.subr.bf16.mxu0 0
      %503 = vmatpush1.bf16.msra.mxu0 %v414
      %504 = vmatprep.subr.bf16.mxu0 0
      %505 = vmatpush1.bf16.msra.mxu0 %v417
      %506 = vmatprep.subr.bf16.mxu0 0
      %507 = vmatpush1.bf16.msra.mxu0 %v420
      %508 = vmatprep.subr.bf16.mxu0 0
      %509 = vmatpush1.bf16.msra.mxu0 %v423
      %510 = vmatprep.subr.bf16.mxu0 0
      %511 = vmatpush1.bf16.msra.mxu0 %v426
      %512 = vmatprep.subr.bf16.mxu0 0
      %513 = vmatpush1.bf16.msra.mxu0 %v429
      %514 = vmatprep.subr.bf16.mxu0 0
      %515 = vmatpush1.bf16.msra.mxu0 %v432
      %516 = vmatprep.subr.bf16.mxu0 0
      %517 = vmatpush1.bf16.msra.mxu0 0
      %518 = vmatprep.subr.bf16.mxu0 0
      %519 = vmatpush1.bf16.msra.mxu0 0
      %520 = vmatprep.subr.bf16.mxu0 0
      %521 = vmatpush1.bf16.msra.mxu0 0
      %522 = vmatprep.subr.bf16.mxu0 0
      %523 = vmatpush1.bf16.msra.mxu0 0
      %524 = vmatprep.subr.bf16.mxu0 0
      %525 = vmatpush1.bf16.msra.mxu0 0
      %526 = vmatprep.subr.bf16.mxu0 0
      %527 = vmatpush1.bf16.msra.mxu0 0
      %528 = vmatprep.subr.bf16.mxu0 0
      %529 = vmatpush1.bf16.msra.mxu0 0
      %530 = vmatprep.subr.bf16.mxu0 0
      %531 = vmatpush1.bf16.msra.mxu0 0
      %532 = vmatprep.mubr.bf16.mxu0 0
      %533 = vmatmul.mubr.bf16.gmra.mrb[0].mxu0 %v296
      %v534 = vpop.f32.mrb[0].mxu0
      %v535 = vadd.f32 0.0, %v534
      %v536 = vpop.f32.mrb[0].mxu0
      %v537 = vpop.f32.mrb[0].mxu0
      %v538 = vadd.f32 0.0, %v537
      %v539 = vpop.f32.mrb[0].mxu0
      %540 = vdwg.mxu0
      %v541 = vpack.c.bf16 %v496, %v492
      %v542 = vpack.c.bf16 %v498, %v494
      %v543 = vpack.c.bf16 %v538, %v535
      %v544 = vlaneseq
      %v545 = vshrl.u32 %v544, 7
      %v546 = vadd.s32 %v545, 8
      %v547 = vlaneseq
      %v548 = vand.u32 %v547, 127
      %vm549 = vcmp.le.s32.totalorder %v548, %v545
      %vm550 = vcmp.le.s32.totalorder %v548, %v546
      %vm551 = vcmask 261120
      %v553 = vsel %vm551, %v541, 0
      %v556 = vsel %vm551, %v542, 0
      %558 = vmatprep.subr.bf16.mxu0 0
      %559 = vmatpush1.bf16.xpose.msra.mxu0 %v556
      %560 = vmatprep.subr.bf16.mxu0 0
      %561 = vmatpush1.bf16.xpose.msra.mxu0 0
      %562 = vmatprep.subr.bf16.mxu0 0
      %563 = vmatpush1.bf16.xpose.msra.mxu0 0
      %564 = vmatprep.subr.bf16.mxu0 0
      %565 = vmatpush1.bf16.xpose.msra.mxu0 0
      %566 = vmatprep.subr.bf16.mxu0 0
      %567 = vmatpush1.bf16.xpose.msra.mxu0 0
      %568 = vmatprep.subr.bf16.mxu0 0
      %569 = vmatpush1.bf16.xpose.msra.mxu0 0
      %570 = vmatprep.subr.bf16.mxu0 0
      %571 = vmatpush1.bf16.xpose.msra.mxu0 0
      %572 = vmatprep.subr.bf16.mxu0 0
      %573 = vmatpush1.bf16.xpose.msra.mxu0 0
      %574 = vmatprep.subr.bf16.mxu0 0
      %575 = vmatpush1.bf16.xpose.msra.mxu0 0
      %576 = vmatprep.subr.bf16.mxu0 0
      %577 = vmatpush1.bf16.xpose.msra.mxu0 0
      %578 = vmatprep.subr.bf16.mxu0 0
      %579 = vmatpush1.bf16.xpose.msra.mxu0 0
      %580 = vmatprep.subr.bf16.mxu0 0
      %581 = vmatpush1.bf16.xpose.msra.mxu0 0
      %582 = vmatprep.subr.bf16.mxu0 0
      %583 = vmatpush1.bf16.xpose.msra.mxu0 0
      %584 = vmatprep.subr.bf16.mxu0 0
      %585 = vmatpush1.bf16.xpose.msra.mxu0 0
      %586 = vmatprep.subr.bf16.mxu0 0
      %587 = vmatpush1.bf16.xpose.msra.mxu0 0
      %588 = vmatprep.subr.bf16.mxu0 0
      %589 = vmatpush1.bf16.xpose.msra.mxu0 0
      %590 = vmatprep.mubr.bf16.mxu0 0
      %591 = vmatmul.mubr.bf16.gmra.mrb[0].mxu0 %v553
      %v592 = vpop.f32.mrb[0].mxu0
      %v593 = vadd.f32 0.0, %v592
      %v594 = vpop.f32.mrb[0].mxu0
      %v595 = vpop.f32.mrb[0].mxu0
      %v596 = vadd.f32 0.0, %v595
      %v597 = vpop.f32.mrb[0].mxu0
      %598 = vdwg.mxu0
      %v599 = vmul.f32 %v593, 0.17677669
      %v600 = vmul.f32 %v596, 0.17677669
      %v601 = vsel %vm549, %v599, -inf
      %v602 = vsel %vm550, %v600, -inf
      %vm603 = vcmask 130048
      %v604 = vsel %vm603, %v601, -inf
      %605 = vmax.xlane.f32.xlu0 %v604
      %v606 = vpop.xlane.xlu0 %605
      %v607 = vsel %vm603, %v602, -inf
      %608 = vmax.xlane.f32.xlu0 %v607
      %v609 = vpop.xlane.xlu0 %608
      %v610 = vsub.f32 %v601, %v606
      %v611 = vsub.f32 %v602, %v609
      %v612 = vmul.f32 %v610, 1.442695
      %v613 = vpow.pop %v612
      %v614 = vmul.f32 %v611, 1.442695
      %v615 = vpow.pop %v614
      %v616 = vsel %vm603, %v613, 0.0
      %617 = vadd.xlane.f32.xlu0 %v616
      %v618 = vpop.xlane.xlu0 %617
      %v619 = vsel %vm603, %v615, 0.0
      %620 = vadd.xlane.f32.xlu0 %v619
      %v621 = vpop.xlane.xlu0 %620
      %v622 = vrcp.pop %v618
      %v623 = vrcp.pop %v621
      %v624 = vmul.f32 %v613, %v622
      %v625 = vmul.f32 %v615, %v623
      %v626 = vpack.c.bf16 %v625, %v624
      %v628 = vsel %vm603, %v626, 0
      %630 = vmatprep.subr.bf16.mxu0 0
      %631 = vmatpush1.bf16.msra.mxu0 %v543
      %632 = vmatprep.subr.bf16.mxu0 0
      %633 = vmatpush1.bf16.msra.mxu0 0
      %634 = vmatprep.subr.bf16.mxu0 0
      %635 = vmatpush1.bf16.msra.mxu0 0
      %636 = vmatprep.subr.bf16.mxu0 0
      %637 = vmatpush1.bf16.msra.mxu0 0
      %638 = vmatprep.subr.bf16.mxu0 0
      %639 = vmatpush1.bf16.msra.mxu0 0
      %640 = vmatprep.subr.bf16.mxu0 0
      %641 = vmatpush1.bf16.msra.mxu0 0
      %642 = vmatprep.subr.bf16.mxu0 0
      %643 = vmatpush1.bf16.msra.mxu0 0
      %644 = vmatprep.subr.bf16.mxu0 0
      %645 = vmatpush1.bf16.msra.mxu0 0
      %646 = vmatprep.subr.bf16.mxu0 0
      %647 = vmatpush1.bf16.msra.mxu0 0
      %648 = vmatprep.subr.bf16.mxu0 0
      %649 = vmatpush1.bf16.msra.mxu0 0
      %650 = vmatprep.subr.bf16.mxu0 0
      %651 = vmatpush1.bf16.msra.mxu0 0
      %652 = vmatprep.subr.bf16.mxu0 0
      %653 = vmatpush1.bf16.msra.mxu0 0
      %654 = vmatprep.subr.bf16.mxu0 0
      %655 = vmatpush1.bf16.msra.mxu0 0
      %656 = vmatprep.subr.bf16.mxu0 0
      %657 = vmatpush1.bf16.msra.mxu0 0
      %658 = vmatprep.subr.bf16.mxu0 0
      %659 = vmatpush1.bf16.msra.mxu0 0
      %660 = vmatprep.subr.bf16.mxu0 0
      %661 = vmatpush1.bf16.msra.mxu0 0
      %662 = vmatprep.mubr.bf16.mxu0 0
      %663 = vmatmul.mubr.bf16.gmra.mrb[0].mxu0 %v628
      %v664 = vpop.f32.mrb[0].mxu0
      %v665 = vadd.f32 0.0, %v664
      %v666 = vpop.f32.mrb[0].mxu0
      %v667 = vpop.f32.mrb[0].mxu0
      %v668 = vadd.f32 0.0, %v667
      %v669 = vpop.f32.mrb[0].mxu0
      %670 = vdwg.mxu0
      %672 = vrot.lane.b32.xlu0 %v541, 96
      %v673 = vpop.permute.xlu0 %672
      %675 = vrot.lane.b32.xlu0 %v542, 96
      %v676 = vpop.permute.xlu0 %675
      %v678 = vsel %vm551, %v673, 0
      %v681 = vsel %vm551, %v676, 0
      %683 = vmatprep.subr.bf16.mxu0 0
      %684 = vmatpush1.bf16.xpose.msra.mxu0 %v681
      %685 = vmatprep.subr.bf16.mxu0 0
      %686 = vmatpush1.bf16.xpose.msra.mxu0 0
      %687 = vmatprep.subr.bf16.mxu0 0
      %688 = vmatpush1.bf16.xpose.msra.mxu0 0
      %689 = vmatprep.subr.bf16.mxu0 0
      %690 = vmatpush1.bf16.xpose.msra.mxu0 0
      %691 = vmatprep.subr.bf16.mxu0 0
      %692 = vmatpush1.bf16.xpose.msra.mxu0 0
      %693 = vmatprep.subr.bf16.mxu0 0
      %694 = vmatpush1.bf16.xpose.msra.mxu0 0
      %695 = vmatprep.subr.bf16.mxu0 0
      %696 = vmatpush1.bf16.xpose.msra.mxu0 0
      %697 = vmatprep.subr.bf16.mxu0 0
      %698 = vmatpush1.bf16.xpose.msra.mxu0 0
      %699 = vmatprep.subr.bf16.mxu0 0
      %700 = vmatpush1.bf16.xpose.msra.mxu0 0
      %701 = vmatprep.subr.bf16.mxu0 0
      %702 = vmatpush1.bf16.xpose.msra.mxu0 0
      %703 = vmatprep.subr.bf16.mxu0 0
      %704 = vmatpush1.bf16.xpose.msra.mxu0 0
      %705 = vmatprep.subr.bf16.mxu0 0
      %706 = vmatpush1.bf16.xpose.msra.mxu0 0
      %707 = vmatprep.subr.bf16.mxu0 0
      %708 = vmatpush1.bf16.xpose.msra.mxu0 0
      %709 = vmatprep.subr.bf16.mxu0 0
      %710 = vmatpush1.bf16.xpose.msra.mxu0 0
      %711 = vmatprep.subr.bf16.mxu0 0
      %712 = vmatpush1.bf16.xpose.msra.mxu0 0
      %713 = vmatprep.subr.bf16.mxu0 0
      %714 = vmatpush1.bf16.xpose.msra.mxu0 0
      %715 = vmatprep.mubr.bf16.mxu0 0
      %716 = vmatmul.mubr.bf16.gmra.mrb[0].mxu0 %v678
      %v717 = vpop.f32.mrb[0].mxu0
      %v718 = vadd.f32 0.0, %v717
      %v719 = vpop.f32.mrb[0].mxu0
      %v720 = vpop.f32.mrb[0].mxu0
      %v721 = vadd.f32 0.0, %v720
      %v722 = vpop.f32.mrb[0].mxu0
      %723 = vdwg.mxu0
      %v724 = vmul.f32 %v718, 0.17677669
      %v725 = vmul.f32 %v721, 0.17677669
      %v726 = vsel %vm549, %v724, -inf
      %v727 = vsel %vm550, %v725, -inf
      %v728 = vsel %vm603, %v726, -inf
      %729 = vmax.xlane.f32.xlu0 %v728
      %v730 = vpop.xlane.xlu0 %729
      %v731 = vsel %vm603, %v727, -inf
      %732 = vmax.xlane.f32.xlu0 %v731
      %v733 = vpop.xlane.xlu0 %732
      %v734 = vsub.f32 %v726, %v730
      %v735 = vsub.f32 %v727, %v733
      %v736 = vmul.f32 %v734, 1.442695
      %v737 = vpow.pop %v736
      %v738 = vmul.f32 %v735, 1.442695
      %v739 = vpow.pop %v738
      %v740 = vsel %vm603, %v737, 0.0
      %741 = vadd.xlane.f32.xlu0 %v740
      %v742 = vpop.xlane.xlu0 %741
      %v743 = vsel %vm603, %v739, 0.0
      %744 = vadd.xlane.f32.xlu0 %v743
      %v745 = vpop.xlane.xlu0 %744
      %v746 = vrcp.pop %v742
      %v747 = vrcp.pop %v745
      %v748 = vmul.f32 %v737, %v746
      %v749 = vmul.f32 %v739, %v747
      %v750 = vpack.c.bf16 %v749, %v748
      %752 = vrot.lane.b32.xlu0 %v543, 96
      %v753 = vpop.permute.xlu0 %752
      %v756 = vsel %vm603, %v750, 0
      %758 = vmatprep.subr.bf16.mxu0 0
      %759 = vmatpush1.bf16.msra.mxu0 %v753
      %760 = vmatprep.subr.bf16.mxu0 0
      %761 = vmatpush1.bf16.msra.mxu0 0
      %762 = vmatprep.subr.bf16.mxu0 0
      %763 = vmatpush1.bf16.msra.mxu0 0
      %764 = vmatprep.subr.bf16.mxu0 0
      %765 = vmatpush1.bf16.msra.mxu0 0
      %766 = vmatprep.subr.bf16.mxu0 0
      %767 = vmatpush1.bf16.msra.mxu0 0
      %768 = vmatprep.subr.bf16.mxu0 0
      %769 = vmatpush1.bf16.msra.mxu0 0
      %770 = vmatprep.subr.bf16.mxu0 0
      %771 = vmatpush1.bf16.msra.mxu0 0
      %772 = vmatprep.subr.bf16.mxu0 0
      %773 = vmatpush1.bf16.msra.mxu0 0
      %774 = vmatprep.subr.bf16.mxu0 0
      %775 = vmatpush1.bf16.msra.mxu0 0
      %776 = vmatprep.subr.bf16.mxu0 0
      %777 = vmatpush1.bf16.msra.mxu0 0
      %778 = vmatprep.subr.bf16.mxu0 0
      %779 = vmatpush1.bf16.msra.mxu0 0
      %780 = vmatprep.subr.bf16.mxu0 0
      %781 = vmatpush1.bf16.msra.mxu0 0
      %782 = vmatprep.subr.bf16.mxu0 0
      %783 = vmatpush1.bf16.msra.mxu0 0
      %784 = vmatprep.subr.bf16.mxu0 0
      %785 = vmatpush1.bf16.msra.mxu0 0
      %786 = vmatprep.subr.bf16.mxu0 0
      %787 = vmatpush1.bf16.msra.mxu0 0
      %788 = vmatprep.subr.bf16.mxu0 0
      %789 = vmatpush1.bf16.msra.mxu0 0
      %790 = vmatprep.mubr.bf16.mxu0 0
      %791 = vmatmul.mubr.bf16.gmra.mrb[0].mxu0 %v756
      %v792 = vpop.f32.mrb[0].mxu0
      %v793 = vadd.f32 0.0, %v792
      %v794 = vpop.f32.mrb[0].mxu0
      %v795 = vpop.f32.mrb[0].mxu0
      %v796 = vadd.f32 0.0, %v795
      %v797 = vpop.f32.mrb[0].mxu0
      %798 = vdwg.mxu0
      %799 = vrot.lane.b32.xlu0 %v541, 64
      %v800 = vpop.permute.xlu0 %799
      %801 = vrot.lane.b32.xlu0 %v542, 64
      %v802 = vpop.permute.xlu0 %801
      %v804 = vsel %vm551, %v800, 0
      %v807 = vsel %vm551, %v802, 0
      %809 = vmatprep.subr.bf16.mxu0 0
      %810 = vmatpush1.bf16.xpose.msra.mxu0 %v807
      %811 = vmatprep.subr.bf16.mxu0 0
      %812 = vmatpush1.bf16.xpose.msra.mxu0 0
      %813 = vmatprep.subr.bf16.mxu0 0
      %814 = vmatpush1.bf16.xpose.msra.mxu0 0
      %815 = vmatprep.subr.bf16.mxu0 0
      %816 = vmatpush1.bf16.xpose.msra.mxu0 0
      %817 = vmatprep.subr.bf16.mxu0 0
      %818 = vmatpush1.bf16.xpose.msra.mxu0 0
      %819 = vmatprep.subr.bf16.mxu0 0
      %820 = vmatpush1.bf16.xpose.msra.mxu0 0
      %821 = vmatprep.subr.bf16.mxu0 0
      %822 = vmatpush1.bf16.xpose.msra.mxu0 0
      %823 = vmatprep.subr.bf16.mxu0 0
      %824 = vmatpush1.bf16.xpose.msra.mxu0 0
      %825 = vmatprep.subr.bf16.mxu0 0
      %826 = vmatpush1.bf16.xpose.msra.mxu0 0
      %827 = vmatprep.subr.bf16.mxu0 0
      %828 = vmatpush1.bf16.xpose.msra.mxu0 0
      %829 = vmatprep.subr.bf16.mxu0 0
      %830 = vmatpush1.bf16.xpose.msra.mxu0 0
      %831 = vmatprep.subr.bf16.mxu0 0
      %832 = vmatpush1.bf16.xpose.msra.mxu0 0
      %833 = vmatprep.subr.bf16.mxu0 0
      %834 = vmatpush1.bf16.xpose.msra.mxu0 0
      %835 = vmatprep.subr.bf16.mxu0 0
      %836 = vmatpush1.bf16.xpose.msra.mxu0 0
      %837 = vmatprep.subr.bf16.mxu0 0
      %838 = vmatpush1.bf16.xpose.msra.mxu0 0
      %839 = vmatprep.subr.bf16.mxu0 0
      %840 = vmatpush1.bf16.xpose.msra.mxu0 0
      %841 = vmatprep.mubr.bf16.mxu0 0
      %842 = vmatmul.mubr.bf16.gmra.mrb[0].mxu0 %v804
      %v843 = vpop.f32.mrb[0].mxu0
      %v844 = vadd.f32 0.0, %v843
      %v845 = vpop.f32.mrb[0].mxu0
      %v846 = vpop.f32.mrb[0].mxu0
      %v847 = vadd.f32 0.0, %v846
      %v848 = vpop.f32.mrb[0].mxu0
      %849 = vdwg.mxu0
      %v850 = vmul.f32 %v844, 0.17677669
      %v851 = vmul.f32 %v847, 0.17677669
      %v852 = vsel %vm549, %v850, -inf
      %v853 = vsel %vm550, %v851, -inf
      %v854 = vsel %vm603, %v852, -inf
      %855 = vmax.xlane.f32.xlu0 %v854
      %v856 = vpop.xlane.xlu0 %855
      %v857 = vsel %vm603, %v853, -inf
      %858 = vmax.xlane.f32.xlu0 %v857
      %v859 = vpop.xlane.xlu0 %858
      %v860 = vsub.f32 %v852, %v856
      %v861 = vsub.f32 %v853, %v859
      %v862 = vmul.f32 %v860, 1.442695
      %v863 = vpow.pop %v862
      %v864 = vmul.f32 %v861, 1.442695
      %v865 = vpow.pop %v864
      %v866 = vsel %vm603, %v863, 0.0
      %867 = vadd.xlane.f32.xlu0 %v866
      %v868 = vpop.xlane.xlu0 %867
      %v869 = vsel %vm603, %v865, 0.0
      %870 = vadd.xlane.f32.xlu0 %v869
      %v871 = vpop.xlane.xlu0 %870
      %v872 = vrcp.pop %v868
      %v873 = vrcp.pop %v871
      %v874 = vmul.f32 %v863, %v872
      %v875 = vmul.f32 %v865, %v873
      %v876 = vpack.c.bf16 %v875, %v874
      %877 = vrot.lane.b32.xlu0 %v543, 64
      %v878 = vpop.permute.xlu0 %877
      %v881 = vsel %vm603, %v876, 0
      %883 = vmatprep.subr.bf16.mxu0 0
      %884 = vmatpush1.bf16.msra.mxu0 %v878
      %885 = vmatprep.subr.bf16.mxu0 0
      %886 = vmatpush1.bf16.msra.mxu0 0
      %887 = vmatprep.subr.bf16.mxu0 0
      %888 = vmatpush1.bf16.msra.mxu0 0
      %889 = vmatprep.subr.bf16.mxu0 0
      %890 = vmatpush1.bf16.msra.mxu0 0
      %891 = vmatprep.subr.bf16.mxu0 0
      %892 = vmatpush1.bf16.msra.mxu0 0
      %893 = vmatprep.subr.bf16.mxu0 0
      %894 = vmatpush1.bf16.msra.mxu0 0
      %895 = vmatprep.subr.bf16.mxu0 0
      %896 = vmatpush1.bf16.msra.mxu0 0
      %897 = vmatprep.subr.bf16.mxu0 0
      %898 = vmatpush1.bf16.msra.mxu0 0
      %899 = vmatprep.subr.bf16.mxu0 0
      %900 = vmatpush1.bf16.msra.mxu0 0
      %901 = vmatprep.subr.bf16.mxu0 0
      %902 = vmatpush1.bf16.msra.mxu0 0
      %903 = vmatprep.subr.bf16.mxu0 0
      %904 = vmatpush1.bf16.msra.mxu0 0
      %905 = vmatprep.subr.bf16.mxu0 0
      %906 = vmatpush1.bf16.msra.mxu0 0
      %907 = vmatprep.subr.bf16.mxu0 0
      %908 = vmatpush1.bf16.msra.mxu0 0
      %909 = vmatprep.subr.bf16.mxu0 0
      %910 = vmatpush1.bf16.msra.mxu0 0
      %911 = vmatprep.subr.bf16.mxu0 0
      %912 = vmatpush1.bf16.msra.mxu0 0
      %913 = vmatprep.subr.bf16.mxu0 0
      %914 = vmatpush1.bf16.msra.mxu0 0
      %915 = vmatprep.mubr.bf16.mxu0 0
      %916 = vmatmul.mubr.bf16.gmra.mrb[0].mxu0 %v881
      %v917 = vpop.f32.mrb[0].mxu0
      %v918 = vadd.f32 0.0, %v917
      %v919 = vpop.f32.mrb[0].mxu0
      %v920 = vpop.f32.mrb[0].mxu0
      %v921 = vadd.f32 0.0, %v920
      %v922 = vpop.f32.mrb[0].mxu0
      %923 = vdwg.mxu0
      %924 = vrot.lane.b32.xlu0 %v541, 32
      %v925 = vpop.permute.xlu0 %924
      %926 = vrot.lane.b32.xlu0 %v542, 32
      %v927 = vpop.permute.xlu0 %926
      %v929 = vsel %vm551, %v925, 0
      %v932 = vsel %vm551, %v927, 0
      %934 = vmatprep.subr.bf16.mxu0 0
      %935 = vmatpush1.bf16.xpose.msra.mxu0 %v932
      %936 = vmatprep.subr.bf16.mxu0 0
      %937 = vmatpush1.bf16.xpose.msra.mxu0 0
      %938 = vmatprep.subr.bf16.mxu0 0
      %939 = vmatpush1.bf16.xpose.msra.mxu0 0
      %940 = vmatprep.subr.bf16.mxu0 0
      %941 = vmatpush1.bf16.xpose.msra.mxu0 0
      %942 = vmatprep.subr.bf16.mxu0 0
      %943 = vmatpush1.bf16.xpose.msra.mxu0 0
      %944 = vmatprep.subr.bf16.mxu0 0
      %945 = vmatpush1.bf16.xpose.msra.mxu0 0
      %946 = vmatprep.subr.bf16.mxu0 0
      %947 = vmatpush1.bf16.xpose.msra.mxu0 0
      %948 = vmatprep.subr.bf16.mxu0 0
      %949 = vmatpush1.bf16.xpose.msra.mxu0 0
      %950 = vmatprep.subr.bf16.mxu0 0
      %951 = vmatpush1.bf16.xpose.msra.mxu0 0
      %952 = vmatprep.subr.bf16.mxu0 0
      %953 = vmatpush1.bf16.xpose.msra.mxu0 0
      %954 = vmatprep.subr.bf16.mxu0 0
      %955 = vmatpush1.bf16.xpose.msra.mxu0 0
      %956 = vmatprep.subr.bf16.mxu0 0
      %957 = vmatpush1.bf16.xpose.msra.mxu0 0
      %958 = vmatprep.subr.bf16.mxu0 0
      %959 = vmatpush1.bf16.xpose.msra.mxu0 0
      %960 = vmatprep.subr.bf16.mxu0 0
      %961 = vmatpush1.bf16.xpose.msra.mxu0 0
      %962 = vmatprep.subr.bf16.mxu0 0
      %963 = vmatpush1.bf16.xpose.msra.mxu0 0
      %964 = vmatprep.subr.bf16.mxu0 0
      %965 = vmatpush1.bf16.xpose.msra.mxu0 0
      %966 = vmatprep.mubr.bf16.mxu0 0
      %967 = vmatmul.mubr.bf16.gmra.mrb[0].mxu0 %v929
      %v968 = vpop.f32.mrb[0].mxu0
      %v969 = vadd.f32 0.0, %v968
      %v970 = vpop.f32.mrb[0].mxu0
      %v971 = vpop.f32.mrb[0].mxu0
      %v972 = vadd.f32 0.0, %v971
      %v973 = vpop.f32.mrb[0].mxu0
      %974 = vdwg.mxu0
      %v975 = vmul.f32 %v969, 0.17677669
      %v976 = vmul.f32 %v972, 0.17677669
      %v977 = vsel %vm549, %v975, -inf
      %v978 = vsel %vm550, %v976, -inf
      %v979 = vsel %vm603, %v977, -inf
      %980 = vmax.xlane.f32.xlu0 %v979
      %v981 = vpop.xlane.xlu0 %980
      %v982 = vsel %vm603, %v978, -inf
      %983 = vmax.xlane.f32.xlu0 %v982
      %v984 = vpop.xlane.xlu0 %983
      %v985 = vsub.f32 %v977, %v981
      %v986 = vsub.f32 %v978, %v984
      %v987 = vmul.f32 %v985, 1.442695
      %v988 = vpow.pop %v987
      %v989 = vmul.f32 %v986, 1.442695
      %v990 = vpow.pop %v989
      %v991 = vsel %vm603, %v988, 0.0
      %992 = vadd.xlane.f32.xlu0 %v991
      %v993 = vpop.xlane.xlu0 %992
      %v994 = vsel %vm603, %v990, 0.0
      %995 = vadd.xlane.f32.xlu0 %v994
      %v996 = vpop.xlane.xlu0 %995
      %v997 = vrcp.pop %v993
      %v998 = vrcp.pop %v996
      %v999 = vmul.f32 %v988, %v997
      %v1000 = vmul.f32 %v990, %v998
      %v1001 = vpack.c.bf16 %v1000, %v999
      %1002 = vrot.lane.b32.xlu0 %v543, 32
      %v1003 = vpop.permute.xlu0 %1002
      %v1006 = vsel %vm603, %v1001, 0
      %1008 = vmatprep.subr.bf16.mxu0 0
      %1009 = vmatpush1.bf16.msra.mxu0 %v1003
      %1010 = vmatprep.subr.bf16.mxu0 0
      %1011 = vmatpush1.bf16.msra.mxu0 0
      %1012 = vmatprep.subr.bf16.mxu0 0
      %1013 = vmatpush1.bf16.msra.mxu0 0
      %1014 = vmatprep.subr.bf16.mxu0 0
      %1015 = vmatpush1.bf16.msra.mxu0 0
      %1016 = vmatprep.subr.bf16.mxu0 0
      %1017 = vmatpush1.bf16.msra.mxu0 0
      %1018 = vmatprep.subr.bf16.mxu0 0
      %1019 = vmatpush1.bf16.msra.mxu0 0
      %1020 = vmatprep.subr.bf16.mxu0 0
      %1021 = vmatpush1.bf16.msra.mxu0 0
      %1022 = vmatprep.subr.bf16.mxu0 0
      %1023 = vmatpush1.bf16.msra.mxu0 0
      %1024 = vmatprep.subr.bf16.mxu0 0
      %1025 = vmatpush1.bf16.msra.mxu0 0
      %1026 = vmatprep.subr.bf16.mxu0 0
      %1027 = vmatpush1.bf16.msra.mxu0 0
      %1028 = vmatprep.subr.bf16.mxu0 0
      %1029 = vmatpush1.bf16.msra.mxu0 0
      %1030 = vmatprep.subr.bf16.mxu0 0
      %1031 = vmatpush1.bf16.msra.mxu0 0
      %1032 = vmatprep.subr.bf16.mxu0 0
      %1033 = vmatpush1.bf16.msra.mxu0 0
      %1034 = vmatprep.subr.bf16.mxu0 0
      %1035 = vmatpush1.bf16.msra.mxu0 0
      %1036 = vmatprep.subr.bf16.mxu0 0
      %1037 = vmatpush1.bf16.msra.mxu0 0
      %1038 = vmatprep.subr.bf16.mxu0 0
      %1039 = vmatpush1.bf16.msra.mxu0 0
      %1040 = vmatprep.mubr.bf16.mxu0 0
      %1041 = vmatmul.mubr.bf16.gmra.mrb[0].mxu0 %v1006
      %v1042 = vpop.f32.mrb[0].mxu0
      %v1043 = vadd.f32 0.0, %v1042
      %v1044 = vpop.f32.mrb[0].mxu0
      %v1045 = vpop.f32.mrb[0].mxu0
      %v1046 = vadd.f32 0.0, %v1045
      %v1047 = vpop.f32.mrb[0].mxu0
      %1048 = vdwg.mxu0
      %1051 = vrot.lane.b32.xlu0 %v793, 32
      %v1052 = vpop.permute.xlu0 %1051
      %1053 = vrot.lane.b32.xlu0 %v796, 32
      %v1054 = vpop.permute.xlu0 %1053
      %1059 = vrot.lane.b32.xlu0 %v918, 64
      %v1060 = vpop.permute.xlu0 %1059
      %1061 = vrot.lane.b32.xlu0 %v921, 64
      %v1062 = vpop.permute.xlu0 %1061
      %1067 = vrot.lane.b32.xlu0 %v1043, 96
      %v1068 = vpop.permute.xlu0 %1067
      %1069 = vrot.lane.b32.xlu0 %v1046, 96
      %v1070 = vpop.permute.xlu0 %1069
      %v1073 = vsel %vm551, %v665, %v1052
      %v1074 = vsel %vm551, %v668, %v1054
      %vm1075 = vcmask 523264
      %v1076 = vsel %vm1075, %v1073, %v1060
      %v1077 = vsel %vm1075, %v1074, %v1062
      %vm1078 = vcmask 785408
      %v1079 = vsel %vm1078, %v1076, %v1068
      %v1080 = vsel %vm1078, %v1077, %v1070
      %v1081 = vpack.c.bf16 %v1080, %v1079
      %v1082 = vld [vmem:[%s4] sm:$0xf]
      %v1083 = vld [vmem:[%s4 + $0x4] sm:$0xf]
      %v1084 = vld [vmem:[%s4 + $0x8] sm:$0xf]
      %v1085 = vld [vmem:[%s4 + $0xc] sm:$0xf]
      %v1086 = vld [vmem:[%s4 + $0x10] sm:$0xf]
      %v1087 = vld [vmem:[%s4 + $0x14] sm:$0xf]
      %v1088 = vld [vmem:[%s4 + $0x18] sm:$0xf]
      %v1089 = vld [vmem:[%s4 + $0x1c] sm:$0xf]
      %v1090 = vld [vmem:[%s4 + $0x20] sm:$0xf]
      %v1091 = vld [vmem:[%s4 + $0x24] sm:$0xf]
      %v1092 = vld [vmem:[%s4 + $0x28] sm:$0xf]
      %v1093 = vld [vmem:[%s4 + $0x2c] sm:$0xf]
      %v1094 = vld [vmem:[%s4 + $0x30] sm:$0xf]
      %v1095 = vld [vmem:[%s4 + $0x34] sm:$0xf]
      %v1096 = vld [vmem:[%s4 + $0x38] sm:$0xf]
      %v1097 = vld [vmem:[%s4 + $0x3c] sm:$0xf]
      %v1098 = vld [vmem:[%s5] sm:$0x1]
      %v1100 = vlaneseq
      %v1101 = vshrl.u32 %v1100, 7
      %v1102 = vsub.s32 0, %v1101
      %v1103 = vrot.slane %v1098, %v1102
      %v1121 = vunpack.c.l.b16 %v1082
      %v1122 = vunpack.c.l.b16 %v1083
      %v1123 = vunpack.c.l.b16 %v1084
      %v1124 = vunpack.c.l.b16 %v1085
      %v1125 = vunpack.c.l.b16 %v1086
      %v1126 = vunpack.c.l.b16 %v1087
      %v1127 = vunpack.c.l.b16 %v1088
      %v1128 = vunpack.c.l.b16 %v1089
      %v1129 = vunpack.c.l.b16 %v1090
      %v1130 = vunpack.c.l.b16 %v1091
      %v1131 = vunpack.c.l.b16 %v1092
      %v1132 = vunpack.c.l.b16 %v1093
      %v1133 = vunpack.c.l.b16 %v1094
      %v1134 = vunpack.c.l.b16 %v1095
      %v1135 = vunpack.c.l.b16 %v1096
      %v1136 = vunpack.c.l.b16 %v1097
      %v1137 = vpack.c.b16 %v1122, %v1121
      %v1138 = vpack.c.b16 %v1124, %v1123
      %v1139 = vpack.c.b16 %v1126, %v1125
      %v1140 = vpack.c.b16 %v1128, %v1127
      %v1141 = vpack.c.b16 %v1130, %v1129
      %v1142 = vpack.c.b16 %v1132, %v1131
      %v1143 = vpack.c.b16 %v1134, %v1133
      %v1144 = vpack.c.b16 %v1136, %v1135
      %1153 = vmatprep.subr.bf16.mxu0 0
      %1154 = vmatpush1.bf16.msra.mxu0 %v1137
      %1155 = vmatprep.subr.bf16.mxu0 0
      %1156 = vmatpush1.bf16.msra.mxu0 %v1138
      %1157 = vmatprep.subr.bf16.mxu0 0
      %1158 = vmatpush1.bf16.msra.mxu0 %v1139
      %1159 = vmatprep.subr.bf16.mxu0 0
      %1160 = vmatpush1.bf16.msra.mxu0 %v1140
      %1161 = vmatprep.subr.bf16.mxu0 0
      %1162 = vmatpush1.bf16.msra.mxu0 %v1141
      %1163 = vmatprep.subr.bf16.mxu0 0
      %1164 = vmatpush1.bf16.msra.mxu0 %v1142
      %1165 = vmatprep.subr.bf16.mxu0 0
      %1166 = vmatpush1.bf16.msra.mxu0 %v1143
      %1167 = vmatprep.subr.bf16.mxu0 0
      %1168 = vmatpush1.bf16.msra.mxu0 %v1144
      %1169 = vmatprep.subr.bf16.mxu0 0
      %1170 = vmatpush1.bf16.msra.mxu0 0
      %1171 = vmatprep.subr.bf16.mxu0 0
      %1172 = vmatpush1.bf16.msra.mxu0 0
      %1173 = vmatprep.subr.bf16.mxu0 0
      %1174 = vmatpush1.bf16.msra.mxu0 0
      %1175 = vmatprep.subr.bf16.mxu0 0
      %1176 = vmatpush1.bf16.msra.mxu0 0
      %1177 = vmatprep.subr.bf16.mxu0 0
      %1178 = vmatpush1.bf16.msra.mxu0 0
      %1179 = vmatprep.subr.bf16.mxu0 0
      %1180 = vmatpush1.bf16.msra.mxu0 0
      %1181 = vmatprep.subr.bf16.mxu0 0
      %1182 = vmatpush1.bf16.msra.mxu0 0
      %1183 = vmatprep.subr.bf16.mxu0 0
      %1184 = vmatpush1.bf16.msra.mxu0 0
      %1185 = vmatprep.mubr.bf16.mxu0 0
      %1186 = vmatmul.mubr.bf16.gmra.mrb[0].mxu0 %v1081
      %v1187 = vpop.f32.mrb[0].mxu0
      %v1188 = vadd.f32 %v1103, %v1187
      %v1189 = vpop.f32.mrb[0].mxu0
      %v1190 = vpop.f32.mrb[0].mxu0
      %v1191 = vadd.f32 %v1103, %v1190
      %v1192 = vpop.f32.mrb[0].mxu0
      %1193 = vdwg.mxu0
      %v1194 = vadd.f32 %v253, %v1188
      %v1195 = vadd.f32 %v254, %v1191
      %1196 = vst [vmem:[%s251] sm:$0xff] %v1194
      %1197 = vst [vmem:[%s251 + $0x8] sm:$0xff] %v1195
      %p1198 = scmp.lt.s32.totalorder %s17, 1
      %s1199 = scalar_select %p1198, %s17, 1
      %s1200 = smul.addr %s1199, 2
      %s1201 = smul.addr %s1200, 8
      %s1202 = scalar_lea.vmem %s6, %s1201
      // Predicated region
      $region45: #{gpt_forward.5} parent=43 // pred_check
        %p1203 = pneg %p166
      $region46: #{gpt_forward.5} parent=43 // pred_check_branch
        %1205 = sbr.rel (%p1203) target = $region48
      $region47: #{gpt_forward.5} parent=43 // pred_region
        _
      $region48: #{gpt_forward.5} parent=43 // pred_fallthru
        _
    $region44: #{gpt_forward.5} parent=5 // pred_fallthru
      _
    %p1206 = scmp.le.s32.totalorder 2, %s12
    // Predicated region
    $region49: #{gpt_forward.5} parent=5 // pred_check
      %p1207 = pneg %p1206
    $region50: #{gpt_forward.5} parent=5 // pred_check_branch
      %1209 = sbr.rel (%p1207) target = $region52
    $region51: #{gpt_forward.5} parent=5 // pred_region
      %s1210 = ssub.s32 %s12, 2
      // Predicated region
      $region53: #{gpt_forward.5} parent=51 // pred_check
        %p1211 = pneg %p172
      $region54: #{gpt_forward.5} parent=51 // pred_check_branch
        %1213 = sbr.rel (%p1211) target = $region56
      $region55: #{gpt_forward.5} parent=51 // pred_region
        %p1214 = scmp.lt.s32.totalorder %s18, 1
        %s1215 = scalar_select %p1214, %s18, 1
        %s1216 = smul.addr %s1215, 2
        %s1217 = smul.addr %s1216, 8
        %s1218 = scalar_lea.vmem %s6, %s1217
      $region56: #{gpt_forward.5} parent=51 // pred_fallthru
        _
    $region52: #{gpt_forward.5} parent=5 // pred_fallthru
      _
  $region6: #{gpt_forward.5} parent=0 // loop_footer
    %s16 = sadd.s32 1, %s12
  $region7: #{gpt_forward.5} parent=0 // loop_footer_branch
    %11 = sbr.rel target = $region3
  $region8: #{gpt_forward.5} parent=0 // loop_exit
    _

</llo_original>
